<compile_context>
chip_gen: v6e
topology: v6e:2x2x1
jax: 0.10.0
libtpu: 0.0.40
codegen_flags: <defaults>
</compile_context>

<pallas_src>
import functools
import numpy as np
import jax
import jax.numpy as jnp
from jax import lax
from jax.experimental import pallas as pl
from jax.experimental.pallas import tpu as pltpu

LANE = 128
TM_MAX = 1024           # row tile (actual double-buffered footprint ~6 MiB)
TK_MAX = 1024           # contraction tile for A @ h
_VMEM_LIMIT = 48 * 1024 * 1024
_RESIDENT_H_BYTES = 8 * 1024 * 1024   # keep neighbour h resident below this


def _ceil_to(v, m):
    return ((v + m - 1) // m) * m


def _pad2(a, rows, cols):
    return jnp.pad(a, ((0, rows - a.shape[0]), (0, cols - a.shape[1])))


def _pad1(a, n):
    return jnp.pad(a, (0, n - a.shape[0]))


def _row_tile(np_pad, t_max):
    """Largest multiple-of-128 divisor of np_pad that fits t_max; if that gives a
    single tile, split in two so both v7x TensorCores get work."""
    units = np_pad // LANE
    d = max(dd for dd in range(1, units + 1)
            if units % dd == 0 and dd * LANE <= t_max)
    tm = d * LANE
    if np_pad // tm < 2:
        tm = np_pad // 2          # np_pad is a multiple of 128 -> tm multiple of 64
    return tm


def _k_tile(np_pad, t_max):
    units = np_pad // LANE
    d = max(dd for dd in range(1, units + 1)
            if units % dd == 0 and dd * LANE <= t_max)
    return d * LANE


def _build_skip_tables(edge_index_np, np_pad, tm, tk):
    """Per target row-tile: compacted list of non-empty source k-tiles of the
    dense adjacency (padding repeats the last entry so Pallas skips the
    re-fetch) plus the per-row-tile count."""
    src = np.asarray(edge_index_np[0]).astype(np.int64)
    dst = np.asarray(edge_index_np[1]).astype(np.int64)
    m_tiles = np_pad // tm
    k_tiles = np_pad // tk
    nz = np.zeros((m_tiles, k_tiles), dtype=bool)
    nz[dst // tm, src // tk] = True
    cnt = nz.sum(axis=1).astype(np.int32)
    max_k = max(int(cnt.max()), 1)
    kidx = np.zeros((m_tiles, max_k), dtype=np.int32)
    for m in range(m_tiles):
        ks = np.nonzero(nz[m])[0].astype(np.int32)
        if ks.size:
            kidx[m, :ks.size] = ks
            kidx[m, ks.size:] = ks[-1]
    return kidx, cnt


# ---------------------------------------------------------------------------
# Pallas kernels
# ---------------------------------------------------------------------------

def _linear_relu_kernel(x_ref, w_ref, b_ref, o_ref):
    y = jnp.dot(x_ref[...], w_ref[...], preferred_element_type=jnp.float32)
    o_ref[...] = jnp.maximum(y + b_ref[...], 0.0).astype(o_ref.dtype)


def linear_relu_pallas(x, w, b, *, tm, out_dtype=jnp.bfloat16):
    """relu(x @ w + b), row-tiled.  x:[Mp,Kp] bf16, w:[Kp,Np] bf16, b:[Np] f32."""
    M, K = x.shape
    _, Nf = w.shape
    return pl.pallas_call(
        _linear_relu_kernel,
        out_shape=jax.ShapeDtypeStruct((M, Nf), out_dtype),
        grid_spec=pltpu.PrefetchScalarGridSpec(
            num_scalar_prefetch=0, grid=(M // tm,),
            in_specs=[
                pl.BlockSpec((tm, K), lambda i: (i, 0)),
                pl.BlockSpec((K, Nf), lambda i: (0, 0)),
                pl.BlockSpec((1, Nf), lambda i: (0, 0)),
            ],
            out_specs=pl.BlockSpec((tm, Nf), lambda i: (i, 0)),
        ),
        compiler_params=pltpu.CompilerParams(
            dimension_semantics=("parallel",),
            vmem_limit_bytes=_VMEM_LIMIT),
    )(x, w, b.reshape(1, Nf))


def _gin_z_kernel(kidx_ref, kcnt_ref, adj_ref, hnb_ref, hself_ref, w1_ref, b1_ref,
                  z_ref, stats_ref, acc_ref, *, eps, n_real, tm, tk, resident_h):
    """Pass 1 of a GIN layer:  z = ((1+eps)*h + A@h) @ W1 + b1  (row-tiled,
    block-sparse over the contraction) plus masked partial BN statistics of z.

    program_id / num_programs are read only at the kernel top level (never
    inside a pl.when body)."""
    m = pl.program_id(0)
    j = pl.program_id(1)
    last_j = pl.num_programs(1) - 1
    row_base = m * tm
    n_live = kcnt_ref[m]          # number of non-empty source tiles for this row tile

    @pl.when(j == 0)
    def _():
        acc_ref[...] = jnp.zeros_like(acc_ref)

    @pl.when(j < n_live)          # skip all-zero adjacency tiles entirely
    def _():
        a = adj_ref[...].astype(jnp.bfloat16)        # int8 HBM -> bf16 for the MXU
        if resident_h:
            hn = hnb_ref[pl.ds(kidx_ref[m, j] * tk, tk), :]
        else:
            hn = hnb_ref[...]
        acc_ref[...] += jnp.dot(a, hn, preferred_element_type=jnp.float32)

    @pl.when(j == last_j)
    def _():
        pre = (1.0 + eps) * hself_ref[...].astype(jnp.float32) + acc_ref[...]
        z = jnp.dot(pre.astype(jnp.bfloat16), w1_ref[...],
                    preferred_element_type=jnp.float32) + b1_ref[...]
        z_ref[...] = z.astype(z_ref.dtype)
        # masked partial BatchNorm statistics (exclude padded rows >= n_real)
        rid = lax.broadcasted_iota(jnp.int32, (tm, 1), 0) + row_base
        zm = z * (rid < n_real).astype(jnp.float32)
        stats_ref[0:1, :] = jnp.sum(zm, axis=0, keepdims=True)      # sum(z)
        stats_ref[1:2, :] = jnp.sum(zm * z, axis=0, keepdims=True)  # sum(z^2)


def gin_z_pallas(adj, h, w1, b1, kidx, kcnt, *, eps, n_real, tm, tk):
    np_pad = adj.shape[0]
    hp = h.shape[1]
    h2p = w1.shape[1]
    m_tiles = np_pad // tm
    max_k = kidx.shape[1]
    resident_h = np_pad * hp * 2 <= _RESIDENT_H_BYTES
    if resident_h:
        # single full-array block, fetched once (block index never changes)
        hnb_spec = pl.BlockSpec((np_pad, hp), lambda m, k, ki, kc: (0, 0))
    else:
        # fallback for very large N: stream only the non-empty source tiles
        hnb_spec = pl.BlockSpec((tk, hp), lambda m, k, ki, kc: (ki[m, k], 0))

    z, stats = pl.pallas_call(
        functools.partial(_gin_z_kernel, eps=eps, n_real=n_real, tm=tm, tk=tk,
                          resident_h=resident_h),
        out_shape=(jax.ShapeDtypeStruct((np_pad, h2p), jnp.bfloat16),
                   jax.ShapeDtypeStruct((m_tiles * 8, h2p), jnp.float32)),
        grid_spec=pltpu.PrefetchScalarGridSpec(
            num_scalar_prefetch=2, grid=(m_tiles, max_k),
            in_specs=[
                pl.BlockSpec((tm, tk), lambda m, k, ki, kc: (m, ki[m, k])),  # adj i8
                hnb_spec,                                                    # h nbrs
                pl.BlockSpec((tm, hp), lambda m, k, ki, kc: (m, 0)),         # h self
                pl.BlockSpec((hp, h2p), lambda m, k, ki, kc: (0, 0)),        # W1
                pl.BlockSpec((1, h2p), lambda m, k, ki, kc: (0, 0)),         # b1
            ],
            out_specs=[
                pl.BlockSpec((tm, h2p), lambda m, k, ki, kc: (m, 0)),        # z (bf16)
                pl.BlockSpec((8, h2p), lambda m, k, ki, kc: (m, 0)),         # BN stats
            ],
            scratch_shapes=[pltpu.VMEM((tm, hp), jnp.float32)],
        ),
        compiler_params=pltpu.CompilerParams(
            dimension_semantics=("parallel", "arbitrary"),
            vmem_limit_bytes=_VMEM_LIMIT),
    )(kidx, kcnt, adj, h, h, w1, b1.reshape(1, h2p))
    return z, stats, m_tiles


def _gin_out_kernel(z_ref, scale_ref, shift_ref, w2_ref, b2_ref, o_ref, *, final_relu):
    """Pass 2 of a GIN layer: BN-affine + ReLU + Linear(+ReLU)."""
    a = jnp.maximum(z_ref[...].astype(jnp.float32) * scale_ref[...] + shift_ref[...], 0.0)
    out = jnp.dot(a.astype(jnp.bfloat16), w2_ref[...],
                  preferred_element_type=jnp.float32) + b2_ref[...]
    if final_relu:
        out = jnp.maximum(out, 0.0)
    o_ref[...] = out.astype(o_ref.dtype)


def _gin_out_edge_kernel(z_ref, scale_ref, shift_ref, w2_ref, b2_ref, wst_ref,
                         o_ref, st_ref):
    """Pass 2 of the last GIN layer with the edge-score head fused in.
    st columns: 0 -> node_h @ w_src, 1 -> node_h @ w_dst, 2.. -> zero (lane-dense)."""
    a = jnp.maximum(z_ref[...].astype(jnp.float32) * scale_ref[...] + shift_ref[...], 0.0)
    out = jnp.dot(a.astype(jnp.bfloat16), w2_ref[...],
                  preferred_element_type=jnp.float32) + b2_ref[...]
    o_ref[...] = out.astype(o_ref.dtype)
    st_ref[...] = jnp.dot(out.astype(jnp.bfloat16), wst_ref[...],
                          preferred_element_type=jnp.float32)


def gin_out_pallas(z, scale, shift, w2, b2, *, final_relu, out_dtype, tm):
    np_pad, h2p = z.shape
    hp = w2.shape[1]
    return pl.pallas_call(
        functools.partial(_gin_out_kernel, final_relu=final_relu),
        out_shape=jax.ShapeDtypeStruct((np_pad, hp), out_dtype),
        grid_spec=pltpu.PrefetchScalarGridSpec(
            num_scalar_prefetch=0, grid=(np_pad // tm,),
            in_specs=[
                pl.BlockSpec((tm, h2p), lambda m: (m, 0)),
                pl.BlockSpec((1, h2p), lambda m: (0, 0)),
                pl.BlockSpec((1, h2p), lambda m: (0, 0)),
                pl.BlockSpec((h2p, hp), lambda m: (0, 0)),
                pl.BlockSpec((1, hp), lambda m: (0, 0)),
            ],
            out_specs=pl.BlockSpec((tm, hp), lambda m: (m, 0)),
        ),
        compiler_params=pltpu.CompilerParams(
            dimension_semantics=("parallel",),
            vmem_limit_bytes=_VMEM_LIMIT),
    )(z, scale.reshape(1, h2p), shift.reshape(1, h2p), w2, b2.reshape(1, hp))


def gin_out_edge_pallas(z, scale, shift, w2, b2, wst, *, tm):
    np_pad, h2p = z.shape
    hp = w2.shape[1]
    return pl.pallas_call(
        _gin_out_edge_kernel,
        out_shape=(jax.ShapeDtypeStruct((np_pad, hp), jnp.float32),
                   jax.ShapeDtypeStruct((np_pad, LANE), jnp.float32)),
        grid_spec=pltpu.PrefetchScalarGridSpec(
            num_scalar_prefetch=0, grid=(np_pad // tm,),
            in_specs=[
                pl.BlockSpec((tm, h2p), lambda m: (m, 0)),
                pl.BlockSpec((1, h2p), lambda m: (0, 0)),
                pl.BlockSpec((1, h2p), lambda m: (0, 0)),
                pl.BlockSpec((h2p, hp), lambda m: (0, 0)),
                pl.BlockSpec((1, hp), lambda m: (0, 0)),
                pl.BlockSpec((hp, LANE), lambda m: (0, 0)),
            ],
            out_specs=[
                pl.BlockSpec((tm, hp), lambda m: (m, 0)),
                pl.BlockSpec((tm, LANE), lambda m: (m, 0)),
            ],
        ),
        compiler_params=pltpu.CompilerParams(
            dimension_semantics=("parallel",),
            vmem_limit_bytes=_VMEM_LIMIT),
    )(z, scale.reshape(1, h2p), shift.reshape(1, h2p), w2, b2.reshape(1, hp), wst)


def _bn_fold(stats, m_tiles, n_real, gamma_p, beta_p, bn_eps=1e-5):
    """Reduce per-tile (sum, sumsq) to the global BN affine (scale, shift)."""
    st = stats.reshape(m_tiles, 8, stats.shape[-1])
    s1 = jnp.sum(st[:, 0, :], axis=0)
    s2 = jnp.sum(st[:, 1, :], axis=0)
    mu = s1 / n_real
    var = jnp.maximum(s2 / n_real - mu * mu, 0.0)
    inv = lax.rsqrt(var + bn_eps)
    scale = gamma_p * inv
    shift = beta_p - mu * scale
    return scale, shift


def gin_layer(adj, h_bf16, w1, b1, gamma_p, beta_p, w2, b2, kidx, kcnt, *,
              eps, n_real, final_relu, out_dtype, tm, tk, wst=None):
    z, stats, m_tiles = gin_z_pallas(adj, h_bf16, w1, b1, kidx, kcnt,
                                     eps=eps, n_real=n_real, tm=tm, tk=tk)
    scale, shift = _bn_fold(stats, m_tiles, float(n_real), gamma_p, beta_p)
    if wst is None:
        return gin_out_pallas(z, scale, shift, w2, b2,
                              final_relu=final_relu, out_dtype=out_dtype, tm=tm)
    return gin_out_edge_pallas(z, scale, shift, w2, b2, wst, tm=tm)


# ---------------------------------------------------------------------------
# Host-side glue: split_graph / sparse_topk / relabel (dynamic shapes)
# ---------------------------------------------------------------------------

def split_graph_np(edge_index, batch, edge_score, ratio, eps=1e-12):
    edge_index = np.asarray(edge_index)
    batch = np.asarray(batch)
    score = np.asarray(edge_score, dtype=np.float32)
    index = batch[edge_index[0]]
    # sparse_sort (descending=True)
    fmin, fmax = score.min(), score.max()
    norm = (score - fmin) / (fmax - fmin + eps) - index.astype(np.float32)
    perm = np.argsort(-norm, kind="stable")
    # sparse_topk
    num_graphs = int(index.max()) + 1
    num_edges = np.bincount(index, minlength=num_graphs)
    k = np.ceil(ratio * num_edges.astype(np.float64)).astype(np.int64)
    start = np.concatenate([[0], np.cumsum(num_edges)])
    mask_pos = np.concatenate(
        [np.arange(k[i], dtype=np.int64) + start[i] for i in range(num_graphs)])
    mask = np.zeros(index.shape[0], dtype=bool)
    mask[mask_pos] = True
    topk_perm = perm[mask]
    exc_perm = perm[~mask]
    causal = (edge_index[:, topk_perm], None, score[topk_perm])
    spu = (edge_index[:, exc_perm], None, -score[exc_perm])
    return causal, spu


def relabel_np(node_h, edge_index, batch):
    num_nodes = node_h.shape[0]
    sub_nodes = np.unique(np.asarray(edge_index))
    x_sub = np.asarray(node_h)[sub_nodes]
    batch_sub = np.asarray(batch)[sub_nodes]
    node_idx = np.full((num_nodes,), -1, dtype=np.int64)
    node_idx[sub_nodes] = np.arange(sub_nodes.shape[0], dtype=np.int64)
    new_edge_index = node_idx[np.asarray(edge_index)]
    return x_sub, new_edge_index, batch_sub


# ---------------------------------------------------------------------------
# GAEAttNet forward
# ---------------------------------------------------------------------------

def init_params(key, dim_feat, dim_hidden):
    ks = jax.random.split(key, 8)

    def lin(k, fi, fo):
        w = jax.random.normal(k, (fi, fo), jnp.float32) / jnp.sqrt(float(fi))
        b = jnp.zeros((fo,), jnp.float32)
        return w, b

    p = {}
    p["embed_w"], p["embed_b"] = lin(ks[0], dim_feat, dim_hidden)
    for l, (ka, kb) in enumerate([(ks[1], ks[2]), (ks[3], ks[4])], start=1):
        w1, b1 = lin(ka, dim_hidden, 2 * dim_hidden)
        w2, b2 = lin(kb, 2 * dim_hidden, dim_hidden)
        p[f"l{l}_w1"], p[f"l{l}_b1"] = w1, b1
        p[f"l{l}_w2"], p[f"l{l}_b2"] = w2, b2
        p[f"l{l}_gamma"] = jnp.ones((2 * dim_hidden,), jnp.float32)
        p[f"l{l}_beta"] = jnp.zeros((2 * dim_hidden,), jnp.float32)
    p["edge_w"], p["edge_b"] = lin(ks[5], 2 * dim_hidden, 1)
    return p


@functools.partial(jax.jit, static_argnames=("tm", "tk"))
def _gnn_forward_device(params, x, edge_index, kidx, kcnt, *, tm, tk):
    """Device-side part: 2-layer GIN feature extractor + fused edge scorer."""
    N, F = x.shape
    H = params["embed_w"].shape[1]
    H2 = params["l1_w1"].shape[1]

    Np = _ceil_to(N, LANE)
    Fp = _ceil_to(F, LANE)
    Hp = _ceil_to(H, LANE)
    H2p = _ceil_to(H2, LANE)

    row, col = edge_index[0], edge_index[1]

    # Dense adjacency (target <- source), built DIRECTLY in int8 (no f32
    # intermediate); upcast to bf16 happens inside the kernel on the VPU.
    # Note: edge multiplicities > 127 would overflow int8 (rare multigraphs).
    adj = jnp.zeros((Np, Np), jnp.int8).at[col, row].add(
        jnp.ones(row.shape, jnp.int8))

    # zero-padded / bf16-cast parameters (padded lanes stay exactly zero)
    xw = _pad2(params["embed_w"], Fp, Hp).astype(jnp.bfloat16)
    xb = _pad1(params["embed_b"], Hp)
    x_p = _pad2(x, Np, Fp).astype(jnp.bfloat16)

    def layer_params(l):
        w1 = _pad2(params[f"l{l}_w1"], Hp, H2p).astype(jnp.bfloat16)
        b1 = _pad1(params[f"l{l}_b1"], H2p)
        g = _pad1(params[f"l{l}_gamma"], H2p)
        bt = _pad1(params[f"l{l}_beta"], H2p)
        w2 = _pad2(params[f"l{l}_w2"], H2p, Hp).astype(jnp.bfloat16)
        b2 = _pad1(params[f"l{l}_b2"], Hp)
        return w1, b1, g, bt, w2, b2

    # gnn_node: embedding + 2-layer GIN (without readout)
    h = linear_relu_pallas(x_p, xw, xb, tm=tm, out_dtype=jnp.bfloat16)

    w1, b1, g, bt, w2, b2 = layer_params(1)
    h = gin_layer(adj, h, w1, b1, g, bt, w2, b2, kidx, kcnt,
                  eps=0.0, n_real=N, final_relu=True, out_dtype=jnp.bfloat16,
                  tm=tm, tk=tk)

    # edge-score head:  Linear(2H,1)(cat(h[row], h[col]))
    #                 = h[row] @ w_src + h[col] @ w_dst + b   (fused into layer 2)
    # wst padded to 128 lanes (cols >= 2 zero) so the st store is lane-dense.
    ew = params["edge_w"].reshape(-1)
    wst = jnp.zeros((Hp, LANE), jnp.float32)
    wst = wst.at[:H, 0].set(ew[:H]).at[:H, 1].set(ew[H:]).astype(jnp.bfloat16)

    w1, b1, g, bt, w2, b2 = layer_params(2)
    node_h_p, st = gin_layer(adj, h, w1, b1, g, bt, w2, b2, kidx, kcnt,
                             eps=0.0, n_real=N, final_relu=False,
                             out_dtype=jnp.float32, tm=tm, tk=tk, wst=wst)

    node_h = node_h_p[:N, :H]
    edge_score = st[row, 0] + st[col, 1] + params["edge_b"][0]
    return node_h, edge_score


def _gnn_forward(params, x, edge_index_np):
    """Host wrapper: choose tiles, build block-skip tables, call the jitted part."""
    N = int(x.shape[0])
    Np = _ceil_to(N, LANE)
    tm = _row_tile(Np, TM_MAX)
    tk = _k_tile(Np, TK_MAX)
    kidx, kcnt = _build_skip_tables(edge_index_np, Np, tm, tk)
    return _gnn_forward_device(params, jnp.asarray(x),
                               jnp.asarray(edge_index_np, jnp.int32),
                               jnp.asarray(kidx), jnp.asarray(kcnt),
                               tm=tm, tk=tk)


def gae_att_net_forward(params, x, edge_index, batch, ratio):
    edge_index_np = np.asarray(jax.device_get(edge_index))
    node_h, edge_score = _gnn_forward(params, x, edge_index_np)

    # config.average_edge_attn == 'default'  -> no to_undirected averaging
    # TODO(synk): to_undirected/coalesce branch (average_edge_attn != 'default') not implemented.

    assert edge_index_np.shape[1] != 0
    (causal_edge_index, causal_edge_attr, causal_edge_weight), \
        (spu_edge_index, spu_edge_attr, spu_edge_weight) = split_graph_np(
            edge_index_np, batch, jax.device_get(edge_score), ratio)

    node_h_np = jax.device_get(node_h)
    causal_x, causal_edge_index, causal_batch = relabel_np(
        node_h_np, causal_edge_index, batch)
    spu_x, spu_edge_index, spu_batch = relabel_np(
        node_h_np, spu_edge_index, batch)

    return ((causal_x, causal_edge_index, causal_edge_attr,
             causal_edge_weight, causal_batch),
            (spu_x, spu_edge_index, spu_edge_attr,
             spu_edge_weight, spu_batch),
            edge_score, node_h, x)


# ---------------------------------------------------------------------------

if __name__ == "__main__":
    key = jax.random.PRNGKey(0)
    k_x, k_p = jax.random.split(key)

    # small batch of 2 graphs, 6 nodes each (ring topology, directed both ways)
    num_nodes, dim_feat, dim_hidden = 12, 8, 32
    x = jax.random.normal(k_x, (num_nodes, dim_feat), jnp.float32)
    batch = np.array([0] * 6 + [1] * 6, dtype=np.int64)

    def ring(offset, n):
        src = [offset + i for i in range(n)] + [offset + (i + 1) % n for i in range(n)]
        dst = [offset + (i + 1) % n for i in range(n)] + [offset + i for i in range(n)]
        return src, dst

    s0, d0 = ring(0, 6)
    s1, d1 = ring(6, 6)
    edge_index = np.array([s0 + s1, d0 + d1], dtype=np.int64)   # [2, 24]

    params = init_params(k_p, dim_feat, dim_hidden)

    causal, spu, edge_score, node_h, x_out = gae_att_net_forward(
        params, x, jnp.asarray(edge_index), batch, ratio=0.5)

    jax.block_until_ready(node_h)
    jax.block_until_ready(edge_score)

    # light sanity checks
    assert node_h.shape == (num_nodes, dim_hidden)
    assert edge_score.shape == (edge_index.shape[1],)
    assert causal[1].shape[1] + spu[1].shape[1] == edge_index.shape[1]
    assert np.isfinite(np.asarray(node_h)).all()
    assert np.isfinite(np.asarray(edge_score)).all()

    print("KERNEL_OK")
</pallas_src>

<mosaic_0001>
module attributes {stable_mosaic.version = 11 : i64} {
  func.func @_linear_relu_kernel(%arg0: i32, %arg1: memref<64x128xbf16, #tpu.memory_space<vmem>>, %arg2: memref<128x128xbf16, #tpu.memory_space<vmem>>, %arg3: memref<1x128xf32, #tpu.memory_space<vmem>>, %arg4: memref<64x128xbf16, #tpu.memory_space<vmem>>) attributes {dimension_semantics = [#tpu.dimension_semantics<parallel>], iteration_bounds = array<i64: 2>, scalar_prefetch = 0 : i64, scratch_operands = 0 : i64, tpu.core_type = #tpu.core_type<tc>, window_params = [{transform_indices = @transform_0, window_bounds = array<i64: 64, 128>}, {pipeline_mode = #tpu.pipeline_mode<synchronous>, transform_indices = @transform_1, window_bounds = array<i64: 128, 128>}, {pipeline_mode = #tpu.pipeline_mode<synchronous>, transform_indices = @transform_2, window_bounds = array<i64: 1, 128>}, {transform_indices = @transform_3, window_bounds = array<i64: 64, 128>}]} {
    %c0 = arith.constant 0 : index
    %c0_0 = arith.constant 0 : index
    %0 = vector.load %arg1[%c0, %c0_0] : memref<64x128xbf16, #tpu.memory_space<vmem>>, vector<64x128xbf16>
    %c0_1 = arith.constant 0 : index
    %c0_2 = arith.constant 0 : index
    %1 = vector.load %arg2[%c0_1, %c0_2] : memref<128x128xbf16, #tpu.memory_space<vmem>>, vector<128x128xbf16>
    %cst = arith.constant dense<0.000000e+00> : vector<64x128xf32>
    %2 = tpu.matmul %0, %1, %cst {dimension_numbers = #tpu.dot_dimension_numbers<[1], [0], [0], [1], [0, 0, 1, 1], [], []>} : vector<64x128xbf16>, vector<128x128xbf16>, vector<64x128xf32> -> vector<64x128xf32>
    %c0_3 = arith.constant 0 : index
    %c0_4 = arith.constant 0 : index
    %3 = vector.load %arg3[%c0_3, %c0_4] : memref<1x128xf32, #tpu.memory_space<vmem>>, vector<1x128xf32>
    %4 = vector.broadcast %3 : vector<1x128xf32> to vector<64x128xf32>
    %5 = arith.addf %2, %4 : vector<64x128xf32>
    %cst_5 = arith.constant 0.000000e+00 : f32
    %6 = vector.broadcast %cst_5 : f32 to vector<64x128xf32>
    %7 = arith.maximumf %5, %6 : vector<64x128xf32>
    %8 = arith.truncf %7 : vector<64x128xf32> to vector<64x128xbf16>
    %c0_6 = arith.constant 0 : index
    %c0_7 = arith.constant 0 : index
    %9 = vector.load %arg4[%c0_6, %c0_7] : memref<64x128xbf16, #tpu.memory_space<vmem>>, vector<64x128xbf16>
    tpu.vector_store %arg4[%c0_6, %c0_7], %8 {strides = array<i32>} : memref<64x128xbf16, #tpu.memory_space<vmem>>, vector<64x128xbf16>,
    return
  }
  func.func @transform_0(%arg0: i32) -> (i32, i32) {
    %c0_i32 = arith.constant 0 : i32
    %c0_i32_0 = arith.constant 0 : i32
    return %arg0, %c0_i32 : i32, i32
  }
  func.func @transform_1(%arg0: i32) -> (i32, i32) {
    %c0_i32 = arith.constant 0 : i32
    %c0_i32_0 = arith.constant 0 : i32
    %c0_i32_1 = arith.constant 0 : i32
    return %c0_i32, %c0_i32_0 : i32, i32
  }
  func.func @transform_2(%arg0: i32) -> (i32, i32) {
    %c0_i32 = arith.constant 0 : i32
    %c0_i32_0 = arith.constant 0 : i32
    %c0_i32_1 = arith.constant 0 : i32
    return %c0_i32, %c0_i32_0 : i32, i32
  }
  func.func @transform_3(%arg0: i32) -> (i32, i32) {
    %c0_i32 = arith.constant 0 : i32
    %c0_i32_0 = arith.constant 0 : i32
    return %arg0, %c0_i32 : i32, i32
  }
}

module attributes {stable_mosaic.version = 11 : i64} {
  func.func @_gin_z_kernel(%arg0: i32, %arg1: i32, %arg2: memref<2x1xi32, #tpu.memory_space<smem>>, %arg3: memref<2xi32, #tpu.memory_space<smem>>, %arg4: memref<64x128xi8, #tpu.memory_space<vmem>>, %arg5: memref<128x128xbf16, #tpu.memory_space<vmem>>, %arg6: memref<64x128xbf16, #tpu.memory_space<vmem>>, %arg7: memref<128x128xbf16, #tpu.memory_space<vmem>>, %arg8: memref<1x128xf32, #tpu.memory_space<vmem>>, %arg9: memref<64x128xbf16, #tpu.memory_space<vmem>>, %arg10: memref<8x128xf32, #tpu.memory_space<vmem>>, %arg11: memref<64x128xf32, #tpu.memory_space<vmem>>) attributes {dimension_semantics = [#tpu.dimension_semantics<parallel>, #tpu.dimension_semantics<arbitrary>], iteration_bounds = array<i64: 2, 1>, scalar_prefetch = 2 : i64, scratch_operands = 1 : i64, tpu.core_type = #tpu.core_type<tc>, window_params = [{transform_indices = @transform_0, window_bounds = array<i64: 64, 128>}, {pipeline_mode = #tpu.pipeline_mode<synchronous>, transform_indices = @transform_1, window_bounds = array<i64: 128, 128>}, {transform_indices = @transform_2, window_bounds = array<i64: 64, 128>}, {pipeline_mode = #tpu.pipeline_mode<synchronous>, transform_indices = @transform_3, window_bounds = array<i64: 128, 128>}, {pipeline_mode = #tpu.pipeline_mode<synchronous>, transform_indices = @transform_4, window_bounds = array<i64: 1, 128>}, {transform_indices = @transform_5, window_bounds = array<i64: 64, 128>}, {transform_indices = @transform_6, window_bounds = array<i64: 8, 128>}]} {
    %c64_i32 = arith.constant 64 : i32
    %0 = arith.muli %arg0, %c64_i32 : i32
    %1 = arith.index_cast %arg0 : i32 to index
    %2 = memref.load %arg3[%1] : memref<2xi32, #tpu.memory_space<smem>>
    %c0_i32 = arith.constant 0 : i32
    %3 = arith.cmpi eq, %arg1, %c0_i32 : i32
    %4 = arith.extui %3 : i1 to i32
    %c0_i32_0 = arith.constant 0 : i32
    %5 = arith.cmpi ne, %4, %c0_i32_0 : i32
    scf.if %5 {
      %cst = arith.constant 0.000000e+00 : f32
      %12 = vector.broadcast %cst : f32 to vector<64x128xf32>
      %c0 = arith.constant 0 : index
      %c0_4 = arith.constant 0 : index
      %13 = vector.load %arg11[%c0, %c0_4] : memref<64x128xf32, #tpu.memory_space<vmem>>, vector<64x128xf32>
      tpu.vector_store %arg11[%c0, %c0_4], %12 {strides = array<i32>} : memref<64x128xf32, #tpu.memory_space<vmem>>, vector<64x128xf32>,
    } else {
    }
    %6 = arith.cmpi slt, %arg1, %2 : i32
    %7 = arith.extui %6 : i1 to i32
    %c0_i32_1 = arith.constant 0 : i32
    %8 = arith.cmpi ne, %7, %c0_i32_1 : i32
    scf.if %8 {
      %c0 = arith.constant 0 : index
      %c0_4 = arith.constant 0 : index
      %12 = vector.load %arg4[%c0, %c0_4] : memref<64x128xi8, #tpu.memory_space<vmem>>, vector<64x128xi8>
      %13 = arith.sitofp %12 : vector<64x128xi8> to vector<64x128xbf16>
      %14 = arith.index_cast %arg0 : i32 to index
      %15 = arith.index_cast %arg1 : i32 to index
      %16 = memref.load %arg2[%14, %15] : memref<2x1xi32, #tpu.memory_space<smem>>
      %c128_i32 = arith.constant 128 : i32
      %17 = arith.muli %16, %c128_i32 : i32
      %18 = arith.index_cast %17 : i32 to index
      %c0_5 = arith.constant 0 : index
      %19 = vector.load %arg5[%18, %c0_5] : memref<128x128xbf16, #tpu.memory_space<vmem>>, vector<128x128xbf16>
      %c0_6 = arith.constant 0 : index
      %c0_7 = arith.constant 0 : index
      %20 = vector.load %arg11[%c0_6, %c0_7] : memref<64x128xf32, #tpu.memory_space<vmem>>, vector<64x128xf32>
      %cst = arith.constant dense<0.000000e+00> : vector<64x128xf32>
      %21 = tpu.matmul %13, %19, %cst {dimension_numbers = #tpu.dot_dimension_numbers<[1], [0], [0], [1], [0, 0, 1, 1], [], []>} : vector<64x128xbf16>, vector<128x128xbf16>, vector<64x128xf32> -> vector<64x128xf32>
      %22 = arith.addf %20, %21 : vector<64x128xf32>
      %c0_8 = arith.constant 0 : index
      %c0_9 = arith.constant 0 : index
      %23 = vector.load %arg11[%c0_8, %c0_9] : memref<64x128xf32, #tpu.memory_space<vmem>>, vector<64x128xf32>
      tpu.vector_store %arg11[%c0_8, %c0_9], %22 {strides = array<i32>} : memref<64x128xf32, #tpu.memory_space<vmem>>, vector<64x128xf32>,
    } else {
    }
    %c0_i32_2 = arith.constant 0 : i32
    %9 = arith.cmpi eq, %arg1, %c0_i32_2 : i32
    %10 = arith.extui %9 : i1 to i32
    %c0_i32_3 = arith.constant 0 : i32
    %11 = arith.cmpi ne, %10, %c0_i32_3 : i32
    scf.if %11 {
      %c0 = arith.constant 0 : index
      %c0_4 = arith.constant 0 : index
      %12 = vector.load %arg6[%c0, %c0_4] : memref<64x128xbf16, #tpu.memory_space<vmem>>, vector<64x128xbf16>
      %13 = arith.extf %12 : vector<64x128xbf16> to vector<64x128xf32>
      %cst = arith.constant 1.000000e+00 : f32
      %14 = vector.broadcast %cst : f32 to vector<64x128xf32>
      %15 = arith.mulf %14, %13 : vector<64x128xf32>
      %c0_5 = arith.constant 0 : index
      %c0_6 = arith.constant 0 : index
      %16 = vector.load %arg11[%c0_5, %c0_6] : memref<64x128xf32, #tpu.memory_space<vmem>>, vector<64x128xf32>
      %17 = arith.addf %15, %16 : vector<64x128xf32>
      %18 = arith.truncf %17 : vector<64x128xf32> to vector<64x128xbf16>
      %c0_7 = arith.constant 0 : index
      %c0_8 = arith.constant 0 : index
      %19 = vector.load %arg7[%c0_7, %c0_8] : memref<128x128xbf16, #tpu.memory_space<vmem>>, vector<128x128xbf16>
      %cst_9 = arith.constant dense<0.000000e+00> : vector<64x128xf32>
      %20 = tpu.matmul %18, %19, %cst_9 {dimension_numbers = #tpu.dot_dimension_numbers<[1], [0], [0], [1], [0, 0, 1, 1], [], []>} : vector<64x128xbf16>, vector<128x128xbf16>, vector<64x128xf32> -> vector<64x128xf32>
      %c0_10 = arith.constant 0 : index
      %c0_11 = arith.constant 0 : index
      %21 = vector.load %arg8[%c0_10, %c0_11] : memref<1x128xf32, #tpu.memory_space<vmem>>, vector<1x128xf32>
      %22 = vector.broadcast %21 : vector<1x128xf32> to vector<64x128xf32>
      %23 = arith.addf %20, %22 : vector<64x128xf32>
      %24 = arith.truncf %23 : vector<64x128xf32> to vector<64x128xbf16>
      %c0_12 = arith.constant 0 : index
      %c0_13 = arith.constant 0 : index
      %25 = vector.load %arg9[%c0_12, %c0_13] : memref<64x128xbf16, #tpu.memory_space<vmem>>, vector<64x128xbf16>
      tpu.vector_store %arg9[%c0_12, %c0_13], %24 {strides = array<i32>} : memref<64x128xbf16, #tpu.memory_space<vmem>>, vector<64x128xbf16>,
      %26 = tpu.iota {dimensions = array<i32: 0>} : vector<64x1xi32>
      %27 = vector.broadcast %0 : i32 to vector<64x1xi32>
      %28 = arith.addi %26, %27 : vector<64x1xi32>
      %c12_i32 = arith.constant 12 : i32
      %29 = vector.broadcast %c12_i32 : i32 to vector<64x1xi32>
      %30 = arith.cmpi slt, %28, %29 : vector<64x1xi32>
      %31 = arith.extui %30 : vector<64x1xi1> to vector<64x1xi32>
      %32 = arith.sitofp %31 : vector<64x1xi32> to vector<64x1xf32>
      %33 = vector.broadcast %32 : vector<64x1xf32> to vector<64x128xf32>
      %34 = arith.mulf %23, %33 : vector<64x128xf32>
      %cst_14 = arith.constant dense<0.000000e+00> : vector<128xf32>
      %35 = vector.multi_reduction <add>, %34, %cst_14 [0] : vector<64x128xf32> to vector<128xf32>
      %36 = vector.shape_cast %35 : vector<128xf32> to vector<1x128xf32>
      %c0_15 = arith.constant 0 : index
      %c0_16 = arith.constant 0 : index
      %37 = vector.load %arg10[%c0_15, %c0_16] : memref<8x128xf32, #tpu.memory_space<vmem>>, vector<1x128xf32>
      tpu.vector_store %arg10[%c0_15, %c0_16], %36 {strides = array<i32>} : memref<8x128xf32, #tpu.memory_space<vmem>>, vector<1x128xf32>,
      %38 = arith.mulf %34, %23 : vector<64x128xf32>
      %cst_17 = arith.constant dense<0.000000e+00> : vector<128xf32>
      %39 = vector.multi_reduction <add>, %38, %cst_17 [0] : vector<64x128xf32> to vector<128xf32>
      %40 = vector.shape_cast %39 : vector<128xf32> to vector<1x128xf32>
      %c1 = arith.constant 1 : index
      %c0_18 = arith.constant 0 : index
      %41 = vector.load %arg10[%c1, %c0_18] : memref<8x128xf32, #tpu.memory_space<vmem>>, vector<1x128xf32>
      tpu.vector_store %arg10[%c1, %c0_18], %40 {strides = array<i32>} : memref<8x128xf32, #tpu.memory_space<vmem>>, vector<1x128xf32>,
    } else {
    }
    return
  }
  func.func @transform_0(%arg0: i32, %arg1: i32, %arg2: memref<2x1xi32, #tpu.memory_space<smem>>, %arg3: memref<2xi32, #tpu.memory_space<smem>>) -> (i32, i32) {
    %0 = arith.index_cast %arg0 : i32 to index
    %1 = arith.index_cast %arg1 : i32 to index
    %2 = memref.load %arg2[%0, %1] : memref<2x1xi32, #tpu.memory_space<smem>>
    %c0_i32 = arith.constant 0 : i32
    return %arg0, %2 : i32, i32
  }
  func.func @transform_1(%arg0: i32, %arg1: i32, %arg2: memref<2x1xi32, #tpu.memory_space<smem>>, %arg3: memref<2xi32, #tpu.memory_space<smem>>) -> (i32, i32) {
    %c0_i32 = arith.constant 0 : i32
    %c0_i32_0 = arith.constant 0 : i32
    %c0_i32_1 = arith.constant 0 : i32
    return %c0_i32, %c0_i32_0 : i32, i32
  }
  func.func @transform_2(%arg0: i32, %arg1: i32, %arg2: memref<2x1xi32, #tpu.memory_space<smem>>, %arg3: memref<2xi32, #tpu.memory_space<smem>>) -> (i32, i32) {
    %c0_i32 = arith.constant 0 : i32
    %c0_i32_0 = arith.constant 0 : i32
    return %arg0, %c0_i32 : i32, i32
  }
  func.func @transform_3(%arg0: i32, %arg1: i32, %arg2: memref<2x1xi32, #tpu.memory_space<smem>>, %arg3: memref<2xi32, #tpu.memory_space<smem>>) -> (i32, i32) {
    %c0_i32 = arith.constant 0 : i32
    %c0_i32_0 = arith.constant 0 : i32
    %c0_i32_1 = arith.constant 0 : i32
    return %c0_i32, %c0_i32_0 : i32, i32
  }
  func.func @transform_4(%arg0: i32, %arg1: i32, %arg2: memref<2x1xi32, #tpu.memory_space<smem>>, %arg3: memref<2xi32, #tpu.memory_space<smem>>) -> (i32, i32) {
    %c0_i32 = arith.constant 0 : i32
    %c0_i32_0 = arith.constant 0 : i32
    %c0_i32_1 = arith.constant 0 : i32
    return %c0_i32, %c0_i32_0 : i32, i32
  }
  func.func @transform_5(%arg0: i32, %arg1: i32, %arg2: memref<2x1xi32, #tpu.memory_space<smem>>, %arg3: memref<2xi32, #tpu.memory_space<smem>>) -> (i32, i32) {
    %c0_i32 = arith.constant 0 : i32
    %c0_i32_0 = arith.constant 0 : i32
    return %arg0, %c0_i32 : i32, i32
  }
  func.func @transform_6(%arg0: i32, %arg1: i32, %arg2: memref<2x1xi32, #tpu.memory_space<smem>>, %arg3: memref<2xi32, #tpu.memory_space<smem>>) -> (i32, i32) {
    %c0_i32 = arith.constant 0 : i32
    %c0_i32_0 = arith.constant 0 : i32
    return %arg0, %c0_i32 : i32, i32
  }
}

module attributes {stable_mosaic.version = 11 : i64} {
  func.func @_gin_out_kernel(%arg0: i32, %arg1: memref<64x128xbf16, #tpu.memory_space<vmem>>, %arg2: memref<1x128xf32, #tpu.memory_space<vmem>>, %arg3: memref<1x128xf32, #tpu.memory_space<vmem>>, %arg4: memref<128x128xbf16, #tpu.memory_space<vmem>>, %arg5: memref<1x128xf32, #tpu.memory_space<vmem>>, %arg6: memref<64x128xbf16, #tpu.memory_space<vmem>>) attributes {dimension_semantics = [#tpu.dimension_semantics<parallel>], iteration_bounds = array<i64: 2>, scalar_prefetch = 0 : i64, scratch_operands = 0 : i64, tpu.core_type = #tpu.core_type<tc>, window_params = [{transform_indices = @transform_0, window_bounds = array<i64: 64, 128>}, {pipeline_mode = #tpu.pipeline_mode<synchronous>, transform_indices = @transform_1, window_bounds = array<i64: 1, 128>}, {pipeline_mode = #tpu.pipeline_mode<synchronous>, transform_indices = @transform_2, window_bounds = array<i64: 1, 128>}, {pipeline_mode = #tpu.pipeline_mode<synchronous>, transform_indices = @transform_3, window_bounds = array<i64: 128, 128>}, {pipeline_mode = #tpu.pipeline_mode<synchronous>, transform_indices = @transform_4, window_bounds = array<i64: 1, 128>}, {transform_indices = @transform_5, window_bounds = array<i64: 64, 128>}]} {
    %c0 = arith.constant 0 : index
    %c0_0 = arith.constant 0 : index
    %0 = vector.load %arg1[%c0, %c0_0] : memref<64x128xbf16, #tpu.memory_space<vmem>>, vector<64x128xbf16>
    %1 = arith.extf %0 : vector<64x128xbf16> to vector<64x128xf32>
    %c0_1 = arith.constant 0 : index
    %c0_2 = arith.constant 0 : index
    %2 = vector.load %arg2[%c0_1, %c0_2] : memref<1x128xf32, #tpu.memory_space<vmem>>, vector<1x128xf32>
    %3 = vector.broadcast %2 : vector<1x128xf32> to vector<64x128xf32>
    %4 = arith.mulf %1, %3 : vector<64x128xf32>
    %c0_3 = arith.constant 0 : index
    %c0_4 = arith.constant 0 : index
    %5 = vector.load %arg3[%c0_3, %c0_4] : memref<1x128xf32, #tpu.memory_space<vmem>>, vector<1x128xf32>
    %6 = vector.broadcast %5 : vector<1x128xf32> to vector<64x128xf32>
    %7 = arith.addf %4, %6 : vector<64x128xf32>
    %cst = arith.constant 0.000000e+00 : f32
    %8 = vector.broadcast %cst : f32 to vector<64x128xf32>
    %9 = arith.maximumf %7, %8 : vector<64x128xf32>
    %10 = arith.truncf %9 : vector<64x128xf32> to vector<64x128xbf16>
    %c0_5 = arith.constant 0 : index
    %c0_6 = arith.constant 0 : index
    %11 = vector.load %arg4[%c0_5, %c0_6] : memref<128x128xbf16, #tpu.memory_space<vmem>>, vector<128x128xbf16>
    %cst_7 = arith.constant dense<0.000000e+00> : vector<64x128xf32>
    %12 = tpu.matmul %10, %11, %cst_7 {dimension_numbers = #tpu.dot_dimension_numbers<[1], [0], [0], [1], [0, 0, 1, 1], [], []>} : vector<64x128xbf16>, vector<128x128xbf16>, vector<64x128xf32> -> vector<64x128xf32>
    %c0_8 = arith.constant 0 : index
    %c0_9 = arith.constant 0 : index
    %13 = vector.load %arg5[%c0_8, %c0_9] : memref<1x128xf32, #tpu.memory_space<vmem>>, vector<1x128xf32>
    %14 = vector.broadcast %13 : vector<1x128xf32> to vector<64x128xf32>
    %15 = arith.addf %12, %14 : vector<64x128xf32>
    %cst_10 = arith.constant 0.000000e+00 : f32
    %16 = vector.broadcast %cst_10 : f32 to vector<64x128xf32>
    %17 = arith.maximumf %15, %16 : vector<64x128xf32>
    %18 = arith.truncf %17 : vector<64x128xf32> to vector<64x128xbf16>
    %c0_11 = arith.constant 0 : index
    %c0_12 = arith.constant 0 : index
    %19 = vector.load %arg6[%c0_11, %c0_12] : memref<64x128xbf16, #tpu.memory_space<vmem>>, vector<64x128xbf16>
    tpu.vector_store %arg6[%c0_11, %c0_12], %18 {strides = array<i32>} : memref<64x128xbf16, #tpu.memory_space<vmem>>, vector<64x128xbf16>,
    return
  }
  func.func @transform_0(%arg0: i32) -> (i32, i32) {
    %c0_i32 = arith.constant 0 : i32
    %c0_i32_0 = arith.constant 0 : i32
    return %arg0, %c0_i32 : i32, i32
  }
  func.func @transform_1(%arg0: i32) -> (i32, i32) {
    %c0_i32 = arith.constant 0 : i32
    %c0_i32_0 = arith.constant 0 : i32
    %c0_i32_1 = arith.constant 0 : i32
    return %c0_i32, %c0_i32_0 : i32, i32
  }
  func.func @transform_2(%arg0: i32) -> (i32, i32) {
    %c0_i32 = arith.constant 0 : i32
    %c0_i32_0 = arith.constant 0 : i32
    %c0_i32_1 = arith.constant 0 : i32
    return %c0_i32, %c0_i32_0 : i32, i32
  }
  func.func @transform_3(%arg0: i32) -> (i32, i32) {
    %c0_i32 = arith.constant 0 : i32
    %c0_i32_0 = arith.constant 0 : i32
    %c0_i32_1 = arith.constant 0 : i32
    return %c0_i32, %c0_i32_0 : i32, i32
  }
  func.func @transform_4(%arg0: i32) -> (i32, i32) {
    %c0_i32 = arith.constant 0 : i32
    %c0_i32_0 = arith.constant 0 : i32
    %c0_i32_1 = arith.constant 0 : i32
    return %c0_i32, %c0_i32_0 : i32, i32
  }
  func.func @transform_5(%arg0: i32) -> (i32, i32) {
    %c0_i32 = arith.constant 0 : i32
    %c0_i32_0 = arith.constant 0 : i32
    return %arg0, %c0_i32 : i32, i32
  }
}

module attributes {stable_mosaic.version = 11 : i64} {
  func.func @_gin_out_edge_kernel(%arg0: i32, %arg1: memref<64x128xbf16, #tpu.memory_space<vmem>>, %arg2: memref<1x128xf32, #tpu.memory_space<vmem>>, %arg3: memref<1x128xf32, #tpu.memory_space<vmem>>, %arg4: memref<128x128xbf16, #tpu.memory_space<vmem>>, %arg5: memref<1x128xf32, #tpu.memory_space<vmem>>, %arg6: memref<128x128xbf16, #tpu.memory_space<vmem>>, %arg7: memref<64x128xf32, #tpu.memory_space<vmem>>, %arg8: memref<64x128xf32, #tpu.memory_space<vmem>>) attributes {dimension_semantics = [#tpu.dimension_semantics<parallel>], iteration_bounds = array<i64: 2>, scalar_prefetch = 0 : i64, scratch_operands = 0 : i64, tpu.core_type = #tpu.core_type<tc>, window_params = [{transform_indices = @transform_0, window_bounds = array<i64: 64, 128>}, {pipeline_mode = #tpu.pipeline_mode<synchronous>, transform_indices = @transform_1, window_bounds = array<i64: 1, 128>}, {pipeline_mode = #tpu.pipeline_mode<synchronous>, transform_indices = @transform_2, window_bounds = array<i64: 1, 128>}, {pipeline_mode = #tpu.pipeline_mode<synchronous>, transform_indices = @transform_3, window_bounds = array<i64: 128, 128>}, {pipeline_mode = #tpu.pipeline_mode<synchronous>, transform_indices = @transform_4, window_bounds = array<i64: 1, 128>}, {pipeline_mode = #tpu.pipeline_mode<synchronous>, transform_indices = @transform_5, window_bounds = array<i64: 128, 128>}, {transform_indices = @transform_6, window_bounds = array<i64: 64, 128>}, {transform_indices = @transform_7, window_bounds = array<i64: 64, 128>}]} {
    %c0 = arith.constant 0 : index
    %c0_0 = arith.constant 0 : index
    %0 = vector.load %arg1[%c0, %c0_0] : memref<64x128xbf16, #tpu.memory_space<vmem>>, vector<64x128xbf16>
    %1 = arith.extf %0 : vector<64x128xbf16> to vector<64x128xf32>
    %c0_1 = arith.constant 0 : index
    %c0_2 = arith.constant 0 : index
    %2 = vector.load %arg2[%c0_1, %c0_2] : memref<1x128xf32, #tpu.memory_space<vmem>>, vector<1x128xf32>
    %3 = vector.broadcast %2 : vector<1x128xf32> to vector<64x128xf32>
    %4 = arith.mulf %1, %3 : vector<64x128xf32>
    %c0_3 = arith.constant 0 : index
    %c0_4 = arith.constant 0 : index
    %5 = vector.load %arg3[%c0_3, %c0_4] : memref<1x128xf32, #tpu.memory_space<vmem>>, vector<1x128xf32>
    %6 = vector.broadcast %5 : vector<1x128xf32> to vector<64x128xf32>
    %7 = arith.addf %4, %6 : vector<64x128xf32>
    %cst = arith.constant 0.000000e+00 : f32
    %8 = vector.broadcast %cst : f32 to vector<64x128xf32>
    %9 = arith.maximumf %7, %8 : vector<64x128xf32>
    %10 = arith.truncf %9 : vector<64x128xf32> to vector<64x128xbf16>
    %c0_5 = arith.constant 0 : index
    %c0_6 = arith.constant 0 : index
    %11 = vector.load %arg4[%c0_5, %c0_6] : memref<128x128xbf16, #tpu.memory_space<vmem>>, vector<128x128xbf16>
    %cst_7 = arith.constant dense<0.000000e+00> : vector<64x128xf32>
    %12 = tpu.matmul %10, %11, %cst_7 {dimension_numbers = #tpu.dot_dimension_numbers<[1], [0], [0], [1], [0, 0, 1, 1], [], []>} : vector<64x128xbf16>, vector<128x128xbf16>, vector<64x128xf32> -> vector<64x128xf32>
    %c0_8 = arith.constant 0 : index
    %c0_9 = arith.constant 0 : index
    %13 = vector.load %arg5[%c0_8, %c0_9] : memref<1x128xf32, #tpu.memory_space<vmem>>, vector<1x128xf32>
    %14 = vector.broadcast %13 : vector<1x128xf32> to vector<64x128xf32>
    %15 = arith.addf %12, %14 : vector<64x128xf32>
    %c0_10 = arith.constant 0 : index
    %c0_11 = arith.constant 0 : index
    %16 = vector.load %arg7[%c0_10, %c0_11] : memref<64x128xf32, #tpu.memory_space<vmem>>, vector<64x128xf32>
    tpu.vector_store %arg7[%c0_10, %c0_11], %15 {strides = array<i32>} : memref<64x128xf32, #tpu.memory_space<vmem>>, vector<64x128xf32>,
    %17 = arith.truncf %15 : vector<64x128xf32> to vector<64x128xbf16>
    %c0_12 = arith.constant 0 : index
    %c0_13 = arith.constant 0 : index
    %18 = vector.load %arg6[%c0_12, %c0_13] : memref<128x128xbf16, #tpu.memory_space<vmem>>, vector<128x128xbf16>
    %cst_14 = arith.constant dense<0.000000e+00> : vector<64x128xf32>
    %19 = tpu.matmul %17, %18, %cst_14 {dimension_numbers = #tpu.dot_dimension_numbers<[1], [0], [0], [1], [0, 0, 1, 1], [], []>} : vector<64x128xbf16>, vector<128x128xbf16>, vector<64x128xf32> -> vector<64x128xf32>
    %c0_15 = arith.constant 0 : index
    %c0_16 = arith.constant 0 : index
    %20 = vector.load %arg8[%c0_15, %c0_16] : memref<64x128xf32, #tpu.memory_space<vmem>>, vector<64x128xf32>
    tpu.vector_store %arg8[%c0_15, %c0_16], %19 {strides = array<i32>} : memref<64x128xf32, #tpu.memory_space<vmem>>, vector<64x128xf32>,
    return
  }
  func.func @transform_0(%arg0: i32) -> (i32, i32) {
    %c0_i32 = arith.constant 0 : i32
    %c0_i32_0 = arith.constant 0 : i32
    return %arg0, %c0_i32 : i32, i32
  }
  func.func @transform_1(%arg0: i32) -> (i32, i32) {
    %c0_i32 = arith.constant 0 : i32
    %c0_i32_0 = arith.constant 0 : i32
    %c0_i32_1 = arith.constant 0 : i32
    return %c0_i32, %c0_i32_0 : i32, i32
  }
  func.func @transform_2(%arg0: i32) -> (i32, i32) {
    %c0_i32 = arith.constant 0 : i32
    %c0_i32_0 = arith.constant 0 : i32
    %c0_i32_1 = arith.constant 0 : i32
    return %c0_i32, %c0_i32_0 : i32, i32
  }
  func.func @transform_3(%arg0: i32) -> (i32, i32) {
    %c0_i32 = arith.constant 0 : i32
    %c0_i32_0 = arith.constant 0 : i32
    %c0_i32_1 = arith.constant 0 : i32
    return %c0_i32, %c0_i32_0 : i32, i32
  }
  func.func @transform_4(%arg0: i32) -> (i32, i32) {
    %c0_i32 = arith.constant 0 : i32
    %c0_i32_0 = arith.constant 0 : i32
    %c0_i32_1 = arith.constant 0 : i32
    return %c0_i32, %c0_i32_0 : i32, i32
  }
  func.func @transform_5(%arg0: i32) -> (i32, i32) {
    %c0_i32 = arith.constant 0 : i32
    %c0_i32_0 = arith.constant 0 : i32
    %c0_i32_1 = arith.constant 0 : i32
    return %c0_i32, %c0_i32_0 : i32, i32
  }
  func.func @transform_6(%arg0: i32) -> (i32, i32) {
    %c0_i32 = arith.constant 0 : i32
    %c0_i32_0 = arith.constant 0 : i32
    return %arg0, %c0_i32 : i32, i32
  }
  func.func @transform_7(%arg0: i32) -> (i32, i32) {
    %c0_i32 = arith.constant 0 : i32
    %c0_i32_0 = arith.constant 0 : i32
    return %arg0, %c0_i32 : i32, i32
  }
}

</mosaic_0001>

<llo_original>
// kernel: _gnn_forward_device.5
$region0: #{_gnn_forward_device.5}
  #allocation0 [shape = 'u32[]', space=smem, size = 0x4, offset = 0x4, fixed_abs, tag = 'smem constant byte address 0x4 - core index']
  #allocation1 [shape = 'u32[144,128]{1,0:T(1,128)}', space=vmem, size = 0x12000, scoped, tag = 'internal scratch']
  %s0 = inlined_call_operand.vmem [shape: bf16[128,128], index: 0, kind: input, shape index: {}]
  %s1 = inlined_call_operand.vmem [shape: bf16[128,128], index: 1, kind: input, shape index: {}]
  %s2 = inlined_call_operand.vmem [shape: f32[1,128], index: 2, kind: input, shape index: {}]
  %s3 = inlined_call_operand.vmem [shape: bf16[128,128], index: 3, kind: output, shape index: {}]
  %s4 = sld [smem:[#allocation0]]
  $region45: #{_gnn_forward_device.5} parent=0
    _
  %s6 = ssub.s32 1, %s4
  %s7 = scalar_select 0, %s6, %s4
  loop: start=0, step=1, limit=4
  $region2: #{_gnn_forward_device.5} parent=0 // loop_pre_header
    _
  $region3: #{_gnn_forward_device.5} parent=0 // loop_header
    %s9 = sphi 0, %s13
    %p10 = scmp.ge.s32.totalorder %s9, 4
    %s19 = sphi 0, %s21
    %s22 = sphi 0, %s19
    %s23 = sphi 0, %s22
    %s39 = sphi 0, %s23
    %s43 = sphi 0, %s43
    %s45 = sphi 0, %s43
    %s46 = sphi 0, %s45
    %s60 = sphi 0, %s46
    %s64 = sphi 0, %s64
    %s66 = sphi 0, %s64
    %s67 = sphi 0, %s66
    %s81 = sphi 0, %s67
    %s87 = sphi 0, %s89
    %s90 = sphi 0, %s87
    %s91 = sphi 0, %s90
    %s107 = sphi 0, %s91
  $region4: #{_gnn_forward_device.5} parent=0 // loop_header_branch
    %12 = sbr.rel (%p10) target = $region8
  $region5: #{_gnn_forward_device.5} parent=0 // loop_body
    %s14 = ssub.s32 %s9, 1
    %s15 = ssub.s32 %s9, 2
    %s16 = sadd.s32 %s9, 1
    %s17 = ssub.s32 %s9, %s16
    %p18 = scmp.eq.s32.totalorder %s17, 0
    %s20 = sadd.s32 %s19, 1
    %s21 = scalar_select %p18, %s19, %s20
    %p24 = pneg %p18
    %p25 = scmp.eq.s32.totalorder %s9, 1
    %p26 = por %p24, %p25
    %p27 = scmp.ne.s32.totalorder %s19, %s22
    %p28 = scmp.eq.s32.totalorder %s9, 0
    %p29 = por %p27, %p28
    %p30 = scmp.ne.s32.totalorder %s19, %s22
    %p31 = scmp.eq.s32.totalorder %s14, 1
    %p32 = por %p30, %p31
    %p33 = scmp.ne.s32.totalorder %s22, %s23
    %p34 = scmp.eq.s32.totalorder %s14, 0
    %p35 = por %p33, %p34
    %p36 = scmp.ne.s32.totalorder %s22, %s23
    %p37 = scmp.eq.s32.totalorder %s15, 1
    %p38 = por %p36, %p37
    %p40 = scmp.ne.s32.totalorder %s23, %s39
    %p41 = scmp.eq.s32.totalorder %s15, 0
    %p42 = por %p40, %p41
    %s44 = sadd.s32 %s43, 1
    %p47 = scmp.eq.s32.totalorder %s9, 1
    %p48 = scmp.ne.s32.totalorder %s43, %s45
    %p49 = scmp.eq.s32.totalorder %s9, 0
    %p50 = por %p48, %p49
    %p51 = scmp.ne.s32.totalorder %s43, %s45
    %p52 = scmp.eq.s32.totalorder %s14, 1
    %p53 = por %p51, %p52
    %p54 = scmp.ne.s32.totalorder %s45, %s46
    %p55 = scmp.eq.s32.totalorder %s14, 0
    %p56 = por %p54, %p55
    %p57 = scmp.ne.s32.totalorder %s45, %s46
    %p58 = scmp.eq.s32.totalorder %s15, 1
    %p59 = por %p57, %p58
    %p61 = scmp.ne.s32.totalorder %s46, %s60
    %p62 = scmp.eq.s32.totalorder %s15, 0
    %p63 = por %p61, %p62
    %s65 = sadd.s32 %s64, 1
    %p68 = scmp.eq.s32.totalorder %s9, 1
    %p69 = scmp.ne.s32.totalorder %s64, %s66
    %p70 = scmp.eq.s32.totalorder %s9, 0
    %p71 = por %p69, %p70
    %p72 = scmp.ne.s32.totalorder %s64, %s66
    %p73 = scmp.eq.s32.totalorder %s14, 1
    %p74 = por %p72, %p73
    %p75 = scmp.ne.s32.totalorder %s66, %s67
    %p76 = scmp.eq.s32.totalorder %s14, 0
    %p77 = por %p75, %p76
    %p78 = scmp.ne.s32.totalorder %s66, %s67
    %p79 = scmp.eq.s32.totalorder %s15, 1
    %p80 = por %p78, %p79
    %p82 = scmp.ne.s32.totalorder %s67, %s81
    %p83 = scmp.eq.s32.totalorder %s15, 0
    %p84 = por %p82, %p83
    %s85 = ssub.s32 %s9, %s16
    %p86 = scmp.eq.s32.totalorder %s85, 0
    %s88 = sadd.s32 %s87, 1
    %s89 = scalar_select %p86, %s87, %s88
    %p92 = pneg %p86
    %p93 = scmp.eq.s32.totalorder %s9, 1
    %p94 = por %p92, %p93
    %p95 = scmp.ne.s32.totalorder %s87, %s90
    %p96 = scmp.eq.s32.totalorder %s9, 0
    %p97 = por %p95, %p96
    %p98 = scmp.ne.s32.totalorder %s87, %s90
    %p99 = scmp.eq.s32.totalorder %s14, 1
    %p100 = por %p98, %p99
    %p101 = scmp.ne.s32.totalorder %s90, %s91
    %p102 = scmp.eq.s32.totalorder %s14, 0
    %p103 = por %p101, %p102
    %p104 = scmp.ne.s32.totalorder %s90, %s91
    %p105 = scmp.eq.s32.totalorder %s15, 1
    %p106 = por %p104, %p105
    %p108 = scmp.ne.s32.totalorder %s91, %s107
    %p109 = scmp.eq.s32.totalorder %s15, 0
    %p110 = por %p108, %p109
    %p111 = scmp.le.s32.totalorder 1, %s9
    %p112 = scmp.lt.s32.totalorder %s9, 3
    %p113 = pnand %p111, %p112
    %p114 = pneg %p113
    // Predicated region
    $region9: #{_gnn_forward_device.5} parent=5 // pred_check
      _
    $region10: #{_gnn_forward_device.5} parent=5 // pred_check_branch
      %116 = sbr.rel (%p113) target = $region12
    $region11: #{_gnn_forward_device.5} parent=5 // pred_region
      %s117 = ssub.s32 %s9, 1
      // Predicated region
      $region13: #{_gnn_forward_device.5} parent=11 // pred_check
        %p118 = pneg %p56
      $region14: #{_gnn_forward_device.5} parent=11 // pred_check_branch
        %120 = sbr.rel (%p118) target = $region16
      $region15: #{_gnn_forward_device.5} parent=11 // pred_region
        _
      $region16: #{_gnn_forward_device.5} parent=11 // pred_fallthru
        _
      // Predicated region
      $region17: #{_gnn_forward_device.5} parent=11 // pred_check
        %p121 = pneg %p77
      $region18: #{_gnn_forward_device.5} parent=11 // pred_check_branch
        %123 = sbr.rel (%p121) target = $region20
      $region19: #{_gnn_forward_device.5} parent=11 // pred_region
        _
      $region20: #{_gnn_forward_device.5} parent=11 // pred_fallthru
        _
    $region12: #{_gnn_forward_device.5} parent=5 // pred_fallthru
      _
    %p124 = scmp.lt.s32.totalorder %s9, 2
    // Predicated region
    $region21: #{_gnn_forward_device.5} parent=5 // pred_check
      %p125 = pneg %p124
    $region22: #{_gnn_forward_device.5} parent=5 // pred_check_branch
      %127 = sbr.rel (%p125) target = $region24
    $region23: #{_gnn_forward_device.5} parent=5 // pred_region
      // Predicated region
      $region25: #{_gnn_forward_device.5} parent=23 // pred_check
        %p128 = pneg %p29
      $region26: #{_gnn_forward_device.5} parent=23 // pred_check_branch
        %130 = sbr.rel (%p128) target = $region28
      $region27: #{_gnn_forward_device.5} parent=23 // pred_region
        %s131 = smul.u32 8, %s9
        %p132 = scmp.lt.s32.totalorder %s131, 15
        %s133 = scalar_select %p132, %s131, 15
        %s134 = smul.addr %s133, 4
        %s135 = scalar_lea.vmem %s0, %s134
        %s136 = smul.u32 8, %s9
      $region28: #{_gnn_forward_device.5} parent=23 // pred_fallthru
        _
    $region24: #{_gnn_forward_device.5} parent=5 // pred_fallthru
      _
    %p137 = scmp.le.s32.totalorder 1, %s9
    %p138 = scmp.lt.s32.totalorder %s9, 3
    %p139 = pnand %p137, %p138
    %p140 = pneg %p139
    // Predicated region
    $region29: #{_gnn_forward_device.5} parent=5 // pred_check
      _
    $region30: #{_gnn_forward_device.5} parent=5 // pred_check_branch
      %142 = sbr.rel (%p139) target = $region32
    $region31: #{_gnn_forward_device.5} parent=5 // pred_region
      %s143 = ssub.s32 %s9, 1
      %s144 = smul.u32 8, %s14
      %p145 = scmp.lt.s32.totalorder %s144, 15
      %s146 = scalar_select %p145, %s144, 15
      %s147 = smul.addr %s146, 4
      %s148 = scalar_lea.vmem %s0, %s147
      %p149 = pneg %p35
      %p150 = pneg %p32
      %p151 = pneg %p56
      %p152 = pneg %p53
      %p153 = pneg %p77
      %p154 = pneg %p74
      %p155 = pneg %p103
      %p156 = pneg %p100
      %s157 = smul.u32 8, %s14
      %p158 = scmp.lt.s32.totalorder %s157, 15
      %s159 = scalar_select %p158, %s157, 15
      %s160 = smul.addr %s159, 4
      %s161 = scalar_lea.vmem %s3, %s160
      %s162 = smul.u32 8, %s14
      %p163 = scmp.lt.s32.totalorder %s162, 15
      %s164 = scalar_select %p163, %s162, 15
      %s165 = smul.addr %s164, 4
      %s166 = scalar_lea.vmem %s0, %s165
      %s167 = smul.u32 8, %s14
      %s168 = smul.u32 8, %s14
      %p169 = scmp.lt.s32.totalorder %s168, 15
      %s170 = scalar_select %p169, %s168, 15
      %s171 = smul.addr %s170, 4
      %s172 = scalar_lea.vmem %s3, %s171
      %s173 = smul.u32 8, %s14
      %v175 = vld [vmem:[%s166] sm:$0xf]
      %v176 = vld [vmem:[%s166 + $0x4] sm:$0xf]
      %v177 = vld [vmem:[%s166 + $0x8] sm:$0xf]
      %v178 = vld [vmem:[%s166 + $0xc] sm:$0xf]
      %v179 = vld [vmem:[%s166 + $0x10] sm:$0xf]
      %v180 = vld [vmem:[%s166 + $0x14] sm:$0xf]
      %v181 = vld [vmem:[%s166 + $0x18] sm:$0xf]
      %v182 = vld [vmem:[%s166 + $0x1c] sm:$0xf]
      %v183 = vld [vmem:[%s1] sm:$0xf]
      %v184 = vld [vmem:[%s1 + $0x4] sm:$0xf]
      %v185 = vld [vmem:[%s1 + $0x8] sm:$0xf]
      %v186 = vld [vmem:[%s1 + $0xc] sm:$0xf]
      %v187 = vld [vmem:[%s1 + $0x10] sm:$0xf]
      %v188 = vld [vmem:[%s1 + $0x14] sm:$0xf]
      %v189 = vld [vmem:[%s1 + $0x18] sm:$0xf]
      %v190 = vld [vmem:[%s1 + $0x1c] sm:$0xf]
      %v191 = vld [vmem:[%s1 + $0x20] sm:$0xf]
      %v192 = vld [vmem:[%s1 + $0x24] sm:$0xf]
      %v193 = vld [vmem:[%s1 + $0x28] sm:$0xf]
      %v194 = vld [vmem:[%s1 + $0x2c] sm:$0xf]
      %v195 = vld [vmem:[%s1 + $0x30] sm:$0xf]
      %v196 = vld [vmem:[%s1 + $0x34] sm:$0xf]
      %v197 = vld [vmem:[%s1 + $0x38] sm:$0xf]
      %v198 = vld [vmem:[%s1 + $0x3c] sm:$0xf]
      %v199 = vld [vmem:[%s2] sm:$0x1]
      %v201 = vlaneseq
      %v202 = vshrl.u32 %v201, 7
      %v203 = vsub.s32 0, %v202
      %v204 = vrot.slane %v199, %v203
      %v214 = vunpack.c.l.b16 %v175
      %v215 = vunpack.c.l.b16 %v176
      %v216 = vunpack.c.l.b16 %v177
      %v217 = vunpack.c.l.b16 %v178
      %v218 = vunpack.c.l.b16 %v179
      %v219 = vunpack.c.l.b16 %v180
      %v220 = vunpack.c.l.b16 %v181
      %v221 = vunpack.c.l.b16 %v182
      %v222 = vpack.c.b16 %v215, %v214
      %v223 = vpack.c.b16 %v217, %v216
      %v224 = vpack.c.b16 %v219, %v218
      %v225 = vpack.c.b16 %v221, %v220
      %v246 = vunpack.c.l.b16 %v183
      %v247 = vunpack.c.l.b16 %v184
      %v248 = vunpack.c.l.b16 %v185
      %v249 = vunpack.c.l.b16 %v186
      %v250 = vunpack.c.l.b16 %v187
      %v251 = vunpack.c.l.b16 %v188
      %v252 = vunpack.c.l.b16 %v189
      %v253 = vunpack.c.l.b16 %v190
      %v254 = vunpack.c.l.b16 %v191
      %v255 = vunpack.c.l.b16 %v192
      %v256 = vunpack.c.l.b16 %v193
      %v257 = vunpack.c.l.b16 %v194
      %v258 = vunpack.c.l.b16 %v195
      %v259 = vunpack.c.l.b16 %v196
      %v260 = vunpack.c.l.b16 %v197
      %v261 = vunpack.c.l.b16 %v198
      %v262 = vpack.c.b16 %v247, %v246
      %v263 = vpack.c.b16 %v249, %v248
      %v264 = vpack.c.b16 %v251, %v250
      %v265 = vpack.c.b16 %v253, %v252
      %v266 = vpack.c.b16 %v255, %v254
      %v267 = vpack.c.b16 %v257, %v256
      %v268 = vpack.c.b16 %v259, %v258
      %v269 = vpack.c.b16 %v261, %v260
      %278 = vmatprep.subr.bf16.mxu0 0
      %279 = vmatpush1.bf16.msra.mxu0 %v269
      %280 = vmatprep.subr.bf16.mxu0 0
      %281 = vmatpush1.bf16.msra.mxu0 %v268
      %282 = vmatprep.subr.bf16.mxu0 0
      %283 = vmatpush1.bf16.msra.mxu0 %v267
      %284 = vmatprep.subr.bf16.mxu0 0
      %285 = vmatpush1.bf16.msra.mxu0 %v266
      %286 = vmatprep.subr.bf16.mxu0 0
      %287 = vmatpush1.bf16.msra.mxu0 %v265
      %288 = vmatprep.subr.bf16.mxu0 0
      %289 = vmatpush1.bf16.msra.mxu0 %v264
      %290 = vmatprep.subr.bf16.mxu0 0
      %291 = vmatpush1.bf16.msra.mxu0 %v263
      %292 = vmatprep.subr.bf16.mxu0 0
      %293 = vmatpush1.bf16.msra.mxu0 %v262
      %294 = vmatprep.subr.bf16.mxu0 0
      %295 = vmatpush2.bf16.msra.mxu0 0
      %296 = vmatprep.subr.bf16.mxu0 0
      %297 = vmatpush2.bf16.msra.mxu0 0
      %298 = vmatprep.subr.bf16.mxu0 0
      %299 = vmatpush2.bf16.msra.mxu0 0
      %300 = vmatprep.subr.bf16.mxu0 0
      %301 = vmatpush2.bf16.msra.mxu0 0
      %302 = vmatprep.subr.bf16.mxu0 0
      %303 = vmatpush2.bf16.msra.mxu0 0
      %304 = vmatprep.subr.bf16.mxu0 0
      %305 = vmatpush2.bf16.msra.mxu0 0
      %306 = vmatprep.subr.bf16.mxu0 0
      %307 = vmatpush2.bf16.msra.mxu0 0
      %308 = vmatprep.subr.bf16.mxu0 0
      %309 = vmatpush2.bf16.msra.mxu0 0
      %310 = vmatprep.mubr.bf16.mxu0 0
      %311 = vmatmul.mubr.bf16.gmra.mxu0 %v222
      %v312 = vpop.f32.mrf.mxu0
      %v313 = vadd.f32 %v204, %v312
      %v314 = vpop.f32.mrf.mxu0
      %v315 = vpop.f32.mrf.mxu0
      %v316 = vadd.f32 %v204, %v315
      %v317 = vpop.f32.mrf.mxu0
      %318 = vmatprep.mubr.bf16.mxu0 0
      %319 = vmatmul.mubr.bf16.gmra.mxu0 %v223
      %v320 = vpop.f32.mrf.mxu0
      %v321 = vadd.f32 %v204, %v320
      %v322 = vpop.f32.mrf.mxu0
      %v323 = vpop.f32.mrf.mxu0
      %v324 = vadd.f32 %v204, %v323
      %v325 = vpop.f32.mrf.mxu0
      %326 = vmatprep.mubr.bf16.mxu0 0
      %327 = vmatmul.mubr.bf16.gmra.mxu0 %v224
      %v328 = vpop.f32.mrf.mxu0
      %v329 = vadd.f32 %v204, %v328
      %v330 = vpop.f32.mrf.mxu0
      %v331 = vpop.f32.mrf.mxu0
      %v332 = vadd.f32 %v204, %v331
      %v333 = vpop.f32.mrf.mxu0
      %334 = vmatprep.mubr.bf16.mxu0 0
      %335 = vmatmul.mubr.bf16.gmra.mxu0 %v225
      %v336 = vpop.f32.mrf.mxu0
      %v337 = vadd.f32 %v204, %v336
      %v338 = vpop.f32.mrf.mxu0
      %v339 = vpop.f32.mrf.mxu0
      %v340 = vadd.f32 %v204, %v339
      %v341 = vpop.f32.mrf.mxu0
      %342 = vdwg.mxu0
      %v343 = vmax.f32 %v313, 0.0
      %v344 = vmax.f32 %v316, 0.0
      %v345 = vmax.f32 %v321, 0.0
      %v346 = vmax.f32 %v324, 0.0
      %v347 = vmax.f32 %v329, 0.0
      %v348 = vmax.f32 %v332, 0.0
      %v349 = vmax.f32 %v337, 0.0
      %v350 = vmax.f32 %v340, 0.0
      %v351 = vpack.c.bf16 %v344, %v343
      %v352 = vpack.c.bf16 %v346, %v345
      %v353 = vpack.c.bf16 %v348, %v347
      %v354 = vpack.c.bf16 %v350, %v349
      %v359 = vunpack.c.l.b16 %v351
      %v360 = vunpack.c.h.b16 %v351
      %v361 = vunpack.c.l.b16 %v352
      %v362 = vunpack.c.h.b16 %v352
      %v363 = vunpack.c.l.b16 %v353
      %v364 = vunpack.c.h.b16 %v353
      %v365 = vunpack.c.l.b16 %v354
      %v366 = vunpack.c.h.b16 %v354
      %v367 = vpack.c.b16 %v359, %v359
      %v368 = vpack.c.b16 %v360, %v360
      %v369 = vpack.c.b16 %v361, %v361
      %v370 = vpack.c.b16 %v362, %v362
      %v371 = vpack.c.b16 %v363, %v363
      %v372 = vpack.c.b16 %v364, %v364
      %v373 = vpack.c.b16 %v365, %v365
      %v374 = vpack.c.b16 %v366, %v366
      %383 = vst [vmem:[%s172] sm:$0xf] %v367
      %384 = vst [vmem:[%s172 + $0x4] sm:$0xf] %v368
      %385 = vst [vmem:[%s172 + $0x8] sm:$0xf] %v369
      %386 = vst [vmem:[%s172 + $0xc] sm:$0xf] %v370
      %387 = vst [vmem:[%s172 + $0x10] sm:$0xf] %v371
      %388 = vst [vmem:[%s172 + $0x14] sm:$0xf] %v372
      %389 = vst [vmem:[%s172 + $0x18] sm:$0xf] %v373
      %390 = vst [vmem:[%s172 + $0x1c] sm:$0xf] %v374
      %s391 = smul.u32 8, %s14
      %p392 = scmp.lt.s32.totalorder %s391, 15
      %s393 = scalar_select %p392, %s391, 15
      %s394 = smul.addr %s393, 4
      %s395 = scalar_lea.vmem %s3, %s394
      // Predicated region
      $region33: #{_gnn_forward_device.5} parent=31 // pred_check
        %p396 = pneg %p100
      $region34: #{_gnn_forward_device.5} parent=31 // pred_check_branch
        %398 = sbr.rel (%p396) target = $region36
      $region35: #{_gnn_forward_device.5} parent=31 // pred_region
        %s399 = smul.u32 8, %s14
      $region36: #{_gnn_forward_device.5} parent=31 // pred_fallthru
        _
    $region32: #{_gnn_forward_device.5} parent=5 // pred_fallthru
      _
    %p400 = scmp.le.s32.totalorder 2, %s9
    // Predicated region
    $region37: #{_gnn_forward_device.5} parent=5 // pred_check
      %p401 = pneg %p400
    $region38: #{_gnn_forward_device.5} parent=5 // pred_check_branch
      %403 = sbr.rel (%p401) target = $region40
    $region39: #{_gnn_forward_device.5} parent=5 // pred_region
      %s404 = ssub.s32 %s9, 2
      // Predicated region
      $region41: #{_gnn_forward_device.5} parent=39 // pred_check
        %p405 = pneg %p106
      $region42: #{_gnn_forward_device.5} parent=39 // pred_check_branch
        %407 = sbr.rel (%p405) target = $region44
      $region43: #{_gnn_forward_device.5} parent=39 // pred_region
        %s408 = smul.u32 8, %s15
        %p409 = scmp.lt.s32.totalorder %s408, 15
        %s410 = scalar_select %p409, %s408, 15
        %s411 = smul.addr %s410, 4
        %s412 = scalar_lea.vmem %s3, %s411
      $region44: #{_gnn_forward_device.5} parent=39 // pred_fallthru
        _
    $region40: #{_gnn_forward_device.5} parent=5 // pred_fallthru
      _
  $region6: #{_gnn_forward_device.5} parent=0 // loop_footer
    %s13 = sadd.s32 1, %s9
  $region7: #{_gnn_forward_device.5} parent=0 // loop_footer_branch
    %8 = sbr.rel target = $region3
  $region8: #{_gnn_forward_device.5} parent=0 // loop_exit
    _

// kernel: _gnn_forward_device.6
$region0: #{_gnn_forward_device.6}
  #allocation0 [shape = 'u32[]', space=smem, size = 0x4, offset = 0x4, fixed_abs, tag = 'smem constant byte address 0x4 - core index']
  #allocation1 [shape = 'u32[144,128]{1,0:T(1,128)}', space=vmem, size = 0x12000, scoped, tag = 'internal scratch']
  #allocation2 [shape = 'f32[64,128]{1,0:T(8,128)}', space=vmem, size = 0x8000, scoped, tag = 'scratch operand']
  #allocation3 [shape = 's32[1]{0}', space=sflag, size = 0x4, scoped, tag = 'scoped memory for _gnn_forward_device.6']
  #allocation4 [shape = 'u8[1024]{0}', space=smem, size = 0x400, scoped, tag = 'prefetched SMEM operand 0']
  #allocation5 [shape = 'u8[512]{0}', space=smem, size = 0x200, scoped, tag = 'prefetched SMEM operand 1']
  %s0 = inlined_call_operand.vmem [shape: s32[2,1], index: 0, kind: input, shape index: {}]
  %s1 = inlined_call_operand.vmem [shape: s32[2], index: 1, kind: input, shape index: {}]
  %s2 = inlined_call_operand.vmem [shape: s8[128,128], index: 2, kind: input, shape index: {}]
  %s3 = inlined_call_operand.vmem [shape: bf16[128,128], index: 3, kind: input, shape index: {}, may-alias: {3,4}]
  %s4 = inlined_call_operand.vmem [shape: bf16[128,128], index: 4, kind: input, shape index: {}, may-alias: {3,4}]
  %s5 = inlined_call_operand.vmem [shape: bf16[128,128], index: 5, kind: input, shape index: {}]
  %s6 = inlined_call_operand.vmem [shape: f32[1,128], index: 6, kind: input, shape index: {}]
  %s7 = inlined_call_operand.vmem [shape: bf16[128,128], index: 7, kind: output, shape index: {0}]
  %s8 = inlined_call_operand.vmem [shape: f32[16,128], index: 8, kind: output, shape index: {1}]
  %9 = xla_tuple %s7, %s8
  %s10 = sld [smem:[#allocation0]]
  $region73: #{_gnn_forward_device.6} parent=0
    _
  %s12 = ssub.s32 1, %s10
  %s13 = scalar_select 0, %s12, %s10
  %s14 = sshll.u32 %s0, 4
  %s15 = int_to_ptr.vmem [resolvable:$true] %s14
  %17 = dma.vmem_to_smem %s15, 32, [#allocation4], [#allocation3]
  %s18 = sshll.u32 %s1, 4
  %s19 = int_to_ptr.vmem [resolvable:$true] %s18
  %21 = dma.vmem_to_smem %s19, 16, [#allocation5], [#allocation3]
  %22 = dma.done [#allocation3], 48
  %23 = sfence
  loop: start=0, step=1, limit=4
  $region2: #{_gnn_forward_device.6} parent=0 // loop_pre_header
    _
  $region3: #{_gnn_forward_device.6} parent=0 // loop_header
    %s25 = sphi 0, %s29
    %p26 = scmp.ge.s32.totalorder %s25, 4
    %s32 = sphi 0, %s44
    %s33 = sphi 0, %s40
    %s34 = sphi 0, %s32
    %s35 = sphi 0, %s33
    %s36 = sphi 0, %s34
    %s37 = sphi 0, %s35
    %s65 = sphi 0, %s67
    %s68 = sphi 0, %s65
    %s69 = sphi 0, %s68
    %s85 = sphi 0, %s69
    %s89 = sphi 0, %s89
    %s91 = sphi 0, %s89
    %s92 = sphi 0, %s91
    %s106 = sphi 0, %s92
    %s112 = sphi 0, %s114
    %s115 = sphi 0, %s112
    %s116 = sphi 0, %s115
    %s132 = sphi 0, %s116
    %s136 = sphi 0, %s136
    %s138 = sphi 0, %s136
    %s139 = sphi 0, %s138
    %s153 = sphi 0, %s139
    %s157 = sphi 0, %s157
    %s159 = sphi 0, %s157
    %s160 = sphi 0, %s159
    %s174 = sphi 0, %s160
    %s180 = sphi 0, %s182
    %s183 = sphi 0, %s180
    %s184 = sphi 0, %s183
    %s200 = sphi 0, %s184
    %s206 = sphi 0, %s208
    %s209 = sphi 0, %s206
    %s210 = sphi 0, %s209
    %s226 = sphi 0, %s210
  $region4: #{_gnn_forward_device.6} parent=0 // loop_header_branch
    %28 = sbr.rel (%p26) target = $region8
  $region5: #{_gnn_forward_device.6} parent=0 // loop_body
    %s30 = ssub.s32 %s25, 1
    %s31 = ssub.s32 %s25, 2
    %s38 = sadd.s32 1, %s33
    %p39 = scmp.ge.s32.totalorder %s38, 1
    %s40 = scalar_select %p39, 0, %s38
    %s41 = sadd.s32 1, %s32
    %s42 = scalar_select %p39, %s41, %s32
    %p43 = scmp.ge.s32.totalorder %s42, 2
    %s44 = scalar_select %p43, 0, %s42
    %s45 = sshra.s32 %s33, 7
    %s46 = sand.u32 %s33, 127
    %s47 = sadd.s32 %s45, %s32
    %s48 = smul.u32 %s47, 128
    %s49 = sshra.s32 %s33, 7
    %s50 = sand.u32 %s33, 127
    %s51 = sadd.s32 %s48, %s50
    %s52 = sld [smem:[#allocation4 + %s51]]
    %s53 = sshra.s32 %s40, 7
    %s54 = sand.u32 %s40, 127
    %s55 = sadd.s32 %s53, %s44
    %s56 = smul.u32 %s55, 128
    %s57 = sshra.s32 %s40, 7
    %s58 = sand.u32 %s40, 127
    %s59 = sadd.s32 %s56, %s58
    %s60 = sld [smem:[#allocation4 + %s59]]
    %s61 = ssub.s32 %s32, %s44
    %s62 = ssub.s32 %s52, %s60
    %s63 = sor.u32 %s61, %s62
    %p64 = scmp.eq.s32.totalorder %s63, 0
    %s66 = sadd.s32 %s65, 1
    %s67 = scalar_select %p64, %s65, %s66
    %p70 = pneg %p64
    %p71 = scmp.eq.s32.totalorder %s25, 1
    %p72 = por %p70, %p71
    %p73 = scmp.ne.s32.totalorder %s65, %s68
    %p74 = scmp.eq.s32.totalorder %s25, 0
    %p75 = por %p73, %p74
    %p76 = scmp.ne.s32.totalorder %s65, %s68
    %p77 = scmp.eq.s32.totalorder %s30, 1
    %p78 = por %p76, %p77
    %p79 = scmp.ne.s32.totalorder %s68, %s69
    %p80 = scmp.eq.s32.totalorder %s30, 0
    %p81 = por %p79, %p80
    %p82 = scmp.ne.s32.totalorder %s68, %s69
    %p83 = scmp.eq.s32.totalorder %s31, 1
    %p84 = por %p82, %p83
    %p86 = scmp.ne.s32.totalorder %s69, %s85
    %p87 = scmp.eq.s32.totalorder %s31, 0
    %p88 = por %p86, %p87
    %s90 = sadd.s32 %s89, 1
    %p93 = scmp.eq.s32.totalorder %s25, 1
    %p94 = scmp.ne.s32.totalorder %s89, %s91
    %p95 = scmp.eq.s32.totalorder %s25, 0
    %p96 = por %p94, %p95
    %p97 = scmp.ne.s32.totalorder %s89, %s91
    %p98 = scmp.eq.s32.totalorder %s30, 1
    %p99 = por %p97, %p98
    %p100 = scmp.ne.s32.totalorder %s91, %s92
    %p101 = scmp.eq.s32.totalorder %s30, 0
    %p102 = por %p100, %p101
    %p103 = scmp.ne.s32.totalorder %s91, %s92
    %p104 = scmp.eq.s32.totalorder %s31, 1
    %p105 = por %p103, %p104
    %p107 = scmp.ne.s32.totalorder %s92, %s106
    %p108 = scmp.eq.s32.totalorder %s31, 0
    %p109 = por %p107, %p108
    %s110 = ssub.s32 %s32, %s44
    %p111 = scmp.eq.s32.totalorder %s110, 0
    %s113 = sadd.s32 %s112, 1
    %s114 = scalar_select %p111, %s112, %s113
    %p117 = pneg %p111
    %p118 = scmp.eq.s32.totalorder %s25, 1
    %p119 = por %p117, %p118
    %p120 = scmp.ne.s32.totalorder %s112, %s115
    %p121 = scmp.eq.s32.totalorder %s25, 0
    %p122 = por %p120, %p121
    %p123 = scmp.ne.s32.totalorder %s112, %s115
    %p124 = scmp.eq.s32.totalorder %s30, 1
    %p125 = por %p123, %p124
    %p126 = scmp.ne.s32.totalorder %s115, %s116
    %p127 = scmp.eq.s32.totalorder %s30, 0
    %p128 = por %p126, %p127
    %p129 = scmp.ne.s32.totalorder %s115, %s116
    %p130 = scmp.eq.s32.totalorder %s31, 1
    %p131 = por %p129, %p130
    %p133 = scmp.ne.s32.totalorder %s116, %s132
    %p134 = scmp.eq.s32.totalorder %s31, 0
    %p135 = por %p133, %p134
    %s137 = sadd.s32 %s136, 1
    %p140 = scmp.eq.s32.totalorder %s25, 1
    %p141 = scmp.ne.s32.totalorder %s136, %s138
    %p142 = scmp.eq.s32.totalorder %s25, 0
    %p143 = por %p141, %p142
    %p144 = scmp.ne.s32.totalorder %s136, %s138
    %p145 = scmp.eq.s32.totalorder %s30, 1
    %p146 = por %p144, %p145
    %p147 = scmp.ne.s32.totalorder %s138, %s139
    %p148 = scmp.eq.s32.totalorder %s30, 0
    %p149 = por %p147, %p148
    %p150 = scmp.ne.s32.totalorder %s138, %s139
    %p151 = scmp.eq.s32.totalorder %s31, 1
    %p152 = por %p150, %p151
    %p154 = scmp.ne.s32.totalorder %s139, %s153
    %p155 = scmp.eq.s32.totalorder %s31, 0
    %p156 = por %p154, %p155
    %s158 = sadd.s32 %s157, 1
    %p161 = scmp.eq.s32.totalorder %s25, 1
    %p162 = scmp.ne.s32.totalorder %s157, %s159
    %p163 = scmp.eq.s32.totalorder %s25, 0
    %p164 = por %p162, %p163
    %p165 = scmp.ne.s32.totalorder %s157, %s159
    %p166 = scmp.eq.s32.totalorder %s30, 1
    %p167 = por %p165, %p166
    %p168 = scmp.ne.s32.totalorder %s159, %s160
    %p169 = scmp.eq.s32.totalorder %s30, 0
    %p170 = por %p168, %p169
    %p171 = scmp.ne.s32.totalorder %s159, %s160
    %p172 = scmp.eq.s32.totalorder %s31, 1
    %p173 = por %p171, %p172
    %p175 = scmp.ne.s32.totalorder %s160, %s174
    %p176 = scmp.eq.s32.totalorder %s31, 0
    %p177 = por %p175, %p176
    %s178 = ssub.s32 %s32, %s44
    %p179 = scmp.eq.s32.totalorder %s178, 0
    %s181 = sadd.s32 %s180, 1
    %s182 = scalar_select %p179, %s180, %s181
    %p185 = pneg %p179
    %p186 = scmp.eq.s32.totalorder %s25, 1
    %p187 = por %p185, %p186
    %p188 = scmp.ne.s32.totalorder %s180, %s183
    %p189 = scmp.eq.s32.totalorder %s25, 0
    %p190 = por %p188, %p189
    %p191 = scmp.ne.s32.totalorder %s180, %s183
    %p192 = scmp.eq.s32.totalorder %s30, 1
    %p193 = por %p191, %p192
    %p194 = scmp.ne.s32.totalorder %s183, %s184
    %p195 = scmp.eq.s32.totalorder %s30, 0
    %p196 = por %p194, %p195
    %p197 = scmp.ne.s32.totalorder %s183, %s184
    %p198 = scmp.eq.s32.totalorder %s31, 1
    %p199 = por %p197, %p198
    %p201 = scmp.ne.s32.totalorder %s184, %s200
    %p202 = scmp.eq.s32.totalorder %s31, 0
    %p203 = por %p201, %p202
    %s204 = ssub.s32 %s32, %s44
    %p205 = scmp.eq.s32.totalorder %s204, 0
    %s207 = sadd.s32 %s206, 1
    %s208 = scalar_select %p205, %s206, %s207
    %p211 = pneg %p205
    %p212 = scmp.eq.s32.totalorder %s25, 1
    %p213 = por %p211, %p212
    %p214 = scmp.ne.s32.totalorder %s206, %s209
    %p215 = scmp.eq.s32.totalorder %s25, 0
    %p216 = por %p214, %p215
    %p217 = scmp.ne.s32.totalorder %s206, %s209
    %p218 = scmp.eq.s32.totalorder %s30, 1
    %p219 = por %p217, %p218
    %p220 = scmp.ne.s32.totalorder %s209, %s210
    %p221 = scmp.eq.s32.totalorder %s30, 0
    %p222 = por %p220, %p221
    %p223 = scmp.ne.s32.totalorder %s209, %s210
    %p224 = scmp.eq.s32.totalorder %s31, 1
    %p225 = por %p223, %p224
    %p227 = scmp.ne.s32.totalorder %s210, %s226
    %p228 = scmp.eq.s32.totalorder %s31, 0
    %p229 = por %p227, %p228
    %p230 = scmp.le.s32.totalorder 1, %s25
    %p231 = scmp.lt.s32.totalorder %s25, 3
    %p232 = pnand %p230, %p231
    %p233 = pneg %p232
    // Predicated region
    $region9: #{_gnn_forward_device.6} parent=5 // pred_check
      _
    $region10: #{_gnn_forward_device.6} parent=5 // pred_check_branch
      %235 = sbr.rel (%p232) target = $region12
    $region11: #{_gnn_forward_device.6} parent=5 // pred_region
      %s236 = ssub.s32 %s25, 1
      // Predicated region
      $region13: #{_gnn_forward_device.6} parent=11 // pred_check
        %p237 = pneg %p102
      $region14: #{_gnn_forward_device.6} parent=11 // pred_check_branch
        %239 = sbr.rel (%p237) target = $region16
      $region15: #{_gnn_forward_device.6} parent=11 // pred_region
        _
      $region16: #{_gnn_forward_device.6} parent=11 // pred_fallthru
        _
      // Predicated region
      $region17: #{_gnn_forward_device.6} parent=11 // pred_check
        %p240 = pneg %p149
      $region18: #{_gnn_forward_device.6} parent=11 // pred_check_branch
        %242 = sbr.rel (%p240) target = $region20
      $region19: #{_gnn_forward_device.6} parent=11 // pred_region
        _
      $region20: #{_gnn_forward_device.6} parent=11 // pred_fallthru
        _
      // Predicated region
      $region21: #{_gnn_forward_device.6} parent=11 // pred_check
        %p243 = pneg %p170
      $region22: #{_gnn_forward_device.6} parent=11 // pred_check_branch
        %245 = sbr.rel (%p243) target = $region24
      $region23: #{_gnn_forward_device.6} parent=11 // pred_region
        _
      $region24: #{_gnn_forward_device.6} parent=11 // pred_fallthru
        _
    $region12: #{_gnn_forward_device.6} parent=5 // pred_fallthru
      _
    %p246 = scmp.lt.s32.totalorder %s25, 2
    // Predicated region
    $region25: #{_gnn_forward_device.6} parent=5 // pred_check
      %p247 = pneg %p246
    $region26: #{_gnn_forward_device.6} parent=5 // pred_check_branch
      %249 = sbr.rel (%p247) target = $region28
    $region27: #{_gnn_forward_device.6} parent=5 // pred_region
      // Predicated region
      $region29: #{_gnn_forward_device.6} parent=27 // pred_check
        %p250 = pneg %p75
      $region30: #{_gnn_forward_device.6} parent=27 // pred_check_branch
        %252 = sbr.rel (%p250) target = $region32
      $region31: #{_gnn_forward_device.6} parent=27 // pred_region
        %s253 = sshra.s32 %s33, 7
        %s254 = sand.u32 %s33, 127
        %s255 = sadd.s32 %s253, %s32
        %s256 = smul.u32 %s255, 128
        %s257 = sshra.s32 %s33, 7
        %s258 = sand.u32 %s33, 127
        %s259 = sadd.s32 %s256, %s258
        %s260 = sld [smem:[#allocation4 + %s259]]
        %s261 = smul.u32 8, %s32
        %p262 = scmp.lt.s32.totalorder %s261, 15
        %s263 = scalar_select %p262, %s261, 15
        %p264 = scmp.lt.s32.totalorder %s260, 0
        %s265 = scalar_select %p264, %s260, 0
        %s266 = sadd.s32 %s265, %s263
        %s267 = smul.addr %s266, 2
        %s268 = scalar_lea.vmem %s2, %s267
        %s269 = sshra.s32 %s33, 7
        %s270 = sand.u32 %s33, 127
        %s271 = sadd.s32 %s269, %s32
        %s272 = smul.u32 %s271, 128
        %s273 = sshra.s32 %s33, 7
        %s274 = sand.u32 %s33, 127
        %s275 = sadd.s32 %s272, %s274
        %s276 = sld [smem:[#allocation4 + %s275]]
        %s277 = smul.u32 8, %s32
      $region32: #{_gnn_forward_device.6} parent=27 // pred_fallthru
        _
      // Predicated region
      $region33: #{_gnn_forward_device.6} parent=27 // pred_check
        %p278 = pneg %p122
      $region34: #{_gnn_forward_device.6} parent=27 // pred_check_branch
        %280 = sbr.rel (%p278) target = $region36
      $region35: #{_gnn_forward_device.6} parent=27 // pred_region
        %s281 = smul.u32 8, %s32
        %p282 = scmp.lt.s32.totalorder %s281, 15
        %s283 = scalar_select %p282, %s281, 15
        %s284 = smul.addr %s283, 4
        %s285 = scalar_lea.vmem %s4, %s284
        %s286 = smul.u32 8, %s32
      $region36: #{_gnn_forward_device.6} parent=27 // pred_fallthru
        _
    $region28: #{_gnn_forward_device.6} parent=5 // pred_fallthru
      _
    %p287 = scmp.le.s32.totalorder 1, %s25
    %p288 = scmp.lt.s32.totalorder %s25, 3
    %p289 = pnand %p287, %p288
    %p290 = pneg %p289
    // Predicated region
    $region37: #{_gnn_forward_device.6} parent=5 // pred_check
      _
    $region38: #{_gnn_forward_device.6} parent=5 // pred_check_branch
      %292 = sbr.rel (%p289) target = $region40
    $region39: #{_gnn_forward_device.6} parent=5 // pred_region
      %s293 = ssub.s32 %s25, 1
      %s294 = sshra.s32 %s35, 7
      %s295 = sand.u32 %s35, 127
      %s296 = sadd.s32 %s294, %s34
      %s297 = smul.u32 %s296, 128
      %s298 = sshra.s32 %s35, 7
      %s299 = sand.u32 %s35, 127
      %s300 = sadd.s32 %s297, %s299
      %s301 = sld [smem:[#allocation4 + %s300]]
      %s302 = smul.u32 8, %s34
      %p303 = scmp.lt.s32.totalorder %s302, 15
      %s304 = scalar_select %p303, %s302, 15
      %p305 = scmp.lt.s32.totalorder %s301, 0
      %s306 = scalar_select %p305, %s301, 0
      %s307 = sadd.s32 %s306, %s304
      %s308 = smul.addr %s307, 2
      %s309 = scalar_lea.vmem %s2, %s308
      %p310 = pneg %p81
      %p311 = pneg %p78
      %p312 = pneg %p102
      %p313 = pneg %p99
      %s314 = smul.u32 8, %s34
      %p315 = scmp.lt.s32.totalorder %s314, 15
      %s316 = scalar_select %p315, %s314, 15
      %s317 = smul.addr %s316, 4
      %s318 = scalar_lea.vmem %s4, %s317
      %p319 = pneg %p128
      %p320 = pneg %p125
      %p321 = pneg %p149
      %p322 = pneg %p146
      %p323 = pneg %p170
      %p324 = pneg %p167
      %p325 = pneg %p196
      %p326 = pneg %p193
      %s327 = smul.u32 8, %s34
      %p328 = scmp.lt.s32.totalorder %s327, 15
      %s329 = scalar_select %p328, %s327, 15
      %s330 = smul.addr %s329, 4
      %s331 = scalar_lea.vmem %s7, %s330
      %p332 = pneg %p222
      %p333 = pneg %p219
      %p334 = scmp.lt.s32.totalorder %s34, 1
      %s335 = scalar_select %p334, %s34, 1
      %s336 = smul.addr %s335, 8
      %s337 = scalar_lea.vmem %s8, %s336
      %s338 = sshra.s32 %s35, 7
      %s339 = sand.u32 %s35, 127
      %s340 = sadd.s32 %s338, %s34
      %s341 = smul.u32 %s340, 128
      %s342 = sshra.s32 %s35, 7
      %s343 = sand.u32 %s35, 127
      %s344 = sadd.s32 %s341, %s343
      %s345 = sld [smem:[#allocation4 + %s344]]
      %s346 = smul.u32 8, %s34
      %p347 = scmp.lt.s32.totalorder %s346, 15
      %s348 = scalar_select %p347, %s346, 15
      %p349 = scmp.lt.s32.totalorder %s345, 0
      %s350 = scalar_select %p349, %s345, 0
      %s351 = sadd.s32 %s350, %s348
      %s352 = smul.addr %s351, 2
      %s353 = scalar_lea.vmem %s2, %s352
      %s354 = sshra.s32 %s35, 7
      %s355 = sand.u32 %s35, 127
      %s356 = sadd.s32 %s354, %s34
      %s357 = smul.u32 %s356, 128
      %s358 = sshra.s32 %s35, 7
      %s359 = sand.u32 %s35, 127
      %s360 = sadd.s32 %s357, %s359
      %s361 = sld [smem:[#allocation4 + %s360]]
      %s362 = smul.u32 8, %s34
      %s363 = smul.u32 8, %s34
      %p364 = scmp.lt.s32.totalorder %s363, 15
      %s365 = scalar_select %p364, %s363, 15
      %s366 = smul.addr %s365, 4
      %s367 = scalar_lea.vmem %s4, %s366
      %s368 = smul.u32 8, %s34
      %s369 = smul.u32 8, %s34
      %p370 = scmp.lt.s32.totalorder %s369, 15
      %s371 = scalar_select %p370, %s369, 15
      %s372 = smul.addr %s371, 4
      %s373 = scalar_lea.vmem %s7, %s372
      %s374 = smul.u32 8, %s34
      %p375 = scmp.lt.s32.totalorder %s34, 1
      %s376 = scalar_select %p375, %s34, 1
      %s377 = smul.addr %s376, 8
      %s378 = scalar_lea.vmem %s8, %s377
      %s380 = smul.u32 %s34, 64
      %s381 = sld [smem:[#allocation5 + %s34]]
      %p382 = scmp.eq.s32.totalorder %s35, 0
      // Predicated region
      $region41: #{_gnn_forward_device.6} parent=39 // pred_check
        %p383 = pneg %p382
      $region42: #{_gnn_forward_device.6} parent=39 // pred_check_branch
        %385 = sbr.rel (%p383) target = $region44
      $region43: #{_gnn_forward_device.6} parent=39 // pred_region
        %386 = vst [vmem:[#allocation2] sm:$0xff] 0.0
        %387 = vst [vmem:[#allocation2 + $0x8] sm:$0xff] 0.0
        %388 = vst [vmem:[#allocation2 + $0x10] sm:$0xff] 0.0
        %389 = vst [vmem:[#allocation2 + $0x18] sm:$0xff] 0.0
        %390 = vst [vmem:[#allocation2 + $0x20] sm:$0xff] 0.0
        %391 = vst [vmem:[#allocation2 + $0x28] sm:$0xff] 0.0
        %392 = vst [vmem:[#allocation2 + $0x30] sm:$0xff] 0.0
        %393 = vst [vmem:[#allocation2 + $0x38] sm:$0xff] 0.0
      $region44: #{_gnn_forward_device.6} parent=39 // pred_fallthru
        _
      %p394 = scmp.lt.s32.totalorder %s35, %s381
      // Predicated region
      $region45: #{_gnn_forward_device.6} parent=39 // pred_check
        %p395 = pneg %p394
      $region46: #{_gnn_forward_device.6} parent=39 // pred_check_branch
        %397 = sbr.rel (%p395) target = $region48
      $region47: #{_gnn_forward_device.6} parent=39 // pred_region
        %v398 = vld [vmem:[%s353] sm:$0x3]
        %v399 = vld [vmem:[%s353 + $0x2] sm:$0x3]
        %v400 = vld [vmem:[%s353 + $0x4] sm:$0x3]
        %v401 = vld [vmem:[%s353 + $0x6] sm:$0x3]
        %v402 = vld [vmem:[%s353 + $0x8] sm:$0x3]
        %v403 = vld [vmem:[%s353 + $0xa] sm:$0x3]
        %v404 = vld [vmem:[%s353 + $0xc] sm:$0x3]
        %v405 = vld [vmem:[%s353 + $0xe] sm:$0x3]
        %v406 = vunpack.c.l.s8.bf16 %v398
        %v407 = vunpack.c.l.s8.bf16 %v399
        %v408 = vunpack.c.l.s8.bf16 %v400
        %v409 = vunpack.c.l.s8.bf16 %v401
        %v410 = vunpack.c.l.s8.bf16 %v402
        %v411 = vunpack.c.l.s8.bf16 %v403
        %v412 = vunpack.c.l.s8.bf16 %v404
        %v413 = vunpack.c.l.s8.bf16 %v405
        %s414 = sshra.s32 %s35, 7
        %s415 = sand.u32 %s35, 127
        %s416 = sadd.s32 %s414, %s34
        %s417 = smul.u32 %s416, 128
        %s418 = sshra.s32 %s35, 7
        %s419 = sand.u32 %s35, 127
        %s420 = sadd.s32 %s417, %s419
        %s421 = sld [smem:[#allocation4 + %s420]]
        %s422 = smul.u32 %s421, 128
        %s423 = sshra.s32 %s422, 3
        %s424 = sand.u32 %s422, 7
        %s425 = smul.addr %s423, 4
        %s426 = scalar_lea.vmem %s3, %s425
        %v427 = vld [vmem:[%s426] sm:$0xf]
        %v428 = vld [vmem:[%s426 + $0x4] sm:$0xf]
        %v429 = vld [vmem:[%s426 + $0x8] sm:$0xf]
        %v430 = vld [vmem:[%s426 + $0xc] sm:$0xf]
        %v431 = vld [vmem:[%s426 + $0x10] sm:$0xf]
        %v432 = vld [vmem:[%s426 + $0x14] sm:$0xf]
        %v433 = vld [vmem:[%s426 + $0x18] sm:$0xf]
        %v434 = vld [vmem:[%s426 + $0x1c] sm:$0xf]
        %v435 = vld [vmem:[%s426 + $0x20] sm:$0xf]
        %v436 = vld [vmem:[%s426 + $0x24] sm:$0xf]
        %v437 = vld [vmem:[%s426 + $0x28] sm:$0xf]
        %v438 = vld [vmem:[%s426 + $0x2c] sm:$0xf]
        %v439 = vld [vmem:[%s426 + $0x30] sm:$0xf]
        %v440 = vld [vmem:[%s426 + $0x34] sm:$0xf]
        %v441 = vld [vmem:[%s426 + $0x38] sm:$0xf]
        %v442 = vld [vmem:[%s426 + $0x3c] sm:$0xf]
        %v443 = vld [vmem:[#allocation2] sm:$0xff]
        %v444 = vld [vmem:[#allocation2 + $0x8] sm:$0xff]
        %v445 = vld [vmem:[#allocation2 + $0x10] sm:$0xff]
        %v446 = vld [vmem:[#allocation2 + $0x18] sm:$0xff]
        %v447 = vld [vmem:[#allocation2 + $0x20] sm:$0xff]
        %v448 = vld [vmem:[#allocation2 + $0x28] sm:$0xff]
        %v449 = vld [vmem:[#allocation2 + $0x30] sm:$0xff]
        %v450 = vld [vmem:[#allocation2 + $0x38] sm:$0xff]
        %v459 = vunpack.c.l.b16 %v406
        %v460 = vunpack.c.l.b16 %v407
        %v461 = vunpack.c.l.b16 %v408
        %v462 = vunpack.c.l.b16 %v409
        %v463 = vunpack.c.l.b16 %v410
        %v464 = vunpack.c.l.b16 %v411
        %v465 = vunpack.c.l.b16 %v412
        %v466 = vunpack.c.l.b16 %v413
        %v467 = vpack.c.b16 %v460, %v459
        %v468 = vpack.c.b16 %v462, %v461
        %v469 = vpack.c.b16 %v464, %v463
        %v470 = vpack.c.b16 %v466, %v465
        %v491 = vunpack.c.l.b16 %v427
        %v492 = vunpack.c.l.b16 %v428
        %v493 = vunpack.c.l.b16 %v429
        %v494 = vunpack.c.l.b16 %v430
        %v495 = vunpack.c.l.b16 %v431
        %v496 = vunpack.c.l.b16 %v432
        %v497 = vunpack.c.l.b16 %v433
        %v498 = vunpack.c.l.b16 %v434
        %v499 = vunpack.c.l.b16 %v435
        %v500 = vunpack.c.l.b16 %v436
        %v501 = vunpack.c.l.b16 %v437
        %v502 = vunpack.c.l.b16 %v438
        %v503 = vunpack.c.l.b16 %v439
        %v504 = vunpack.c.l.b16 %v440
        %v505 = vunpack.c.l.b16 %v441
        %v506 = vunpack.c.l.b16 %v442
        %v507 = vpack.c.b16 %v492, %v491
        %v508 = vpack.c.b16 %v494, %v493
        %v509 = vpack.c.b16 %v496, %v495
        %v510 = vpack.c.b16 %v498, %v497
        %v511 = vpack.c.b16 %v500, %v499
        %v512 = vpack.c.b16 %v502, %v501
        %v513 = vpack.c.b16 %v504, %v503
        %v514 = vpack.c.b16 %v506, %v505
        %523 = vmatprep.subr.bf16.mxu0 0
        %524 = vmatpush1.bf16.msra.mxu0 %v514
        %525 = vmatprep.subr.bf16.mxu0 0
        %526 = vmatpush1.bf16.msra.mxu0 %v513
        %527 = vmatprep.subr.bf16.mxu0 0
        %528 = vmatpush1.bf16.msra.mxu0 %v512
        %529 = vmatprep.subr.bf16.mxu0 0
        %530 = vmatpush1.bf16.msra.mxu0 %v511
        %531 = vmatprep.subr.bf16.mxu0 0
        %532 = vmatpush1.bf16.msra.mxu0 %v510
        %533 = vmatprep.subr.bf16.mxu0 0
        %534 = vmatpush1.bf16.msra.mxu0 %v509
        %535 = vmatprep.subr.bf16.mxu0 0
        %536 = vmatpush1.bf16.msra.mxu0 %v508
        %537 = vmatprep.subr.bf16.mxu0 0
        %538 = vmatpush1.bf16.msra.mxu0 %v507
        %539 = vmatprep.subr.bf16.mxu0 0
        %540 = vmatpush2.bf16.msra.mxu0 0
        %541 = vmatprep.subr.bf16.mxu0 0
        %542 = vmatpush2.bf16.msra.mxu0 0
        %543 = vmatprep.subr.bf16.mxu0 0
        %544 = vmatpush2.bf16.msra.mxu0 0
        %545 = vmatprep.subr.bf16.mxu0 0
        %546 = vmatpush2.bf16.msra.mxu0 0
        %547 = vmatprep.subr.bf16.mxu0 0
        %548 = vmatpush2.bf16.msra.mxu0 0
        %549 = vmatprep.subr.bf16.mxu0 0
        %550 = vmatpush2.bf16.msra.mxu0 0
        %551 = vmatprep.subr.bf16.mxu0 0
        %552 = vmatpush2.bf16.msra.mxu0 0
        %553 = vmatprep.subr.bf16.mxu0 0
        %554 = vmatpush2.bf16.msra.mxu0 0
        %555 = vmatprep.mubr.bf16.mxu0 0
        %556 = vmatmul.mubr.bf16.gmra.mxu0 %v467
        %v557 = vpop.f32.mrf.mxu0
        %v558 = vadd.f32 0.0, %v557
        %v559 = vpop.f32.mrf.mxu0
        %v560 = vpop.f32.mrf.mxu0
        %v561 = vadd.f32 0.0, %v560
        %v562 = vpop.f32.mrf.mxu0
        %563 = vmatprep.mubr.bf16.mxu0 0
        %564 = vmatmul.mubr.bf16.gmra.mxu0 %v468
        %v565 = vpop.f32.mrf.mxu0
        %v566 = vadd.f32 0.0, %v565
        %v567 = vpop.f32.mrf.mxu0
        %v568 = vpop.f32.mrf.mxu0
        %v569 = vadd.f32 0.0, %v568
        %v570 = vpop.f32.mrf.mxu0
        %571 = vmatprep.mubr.bf16.mxu0 0
        %572 = vmatmul.mubr.bf16.gmra.mxu0 %v469
        %v573 = vpop.f32.mrf.mxu0
        %v574 = vadd.f32 0.0, %v573
        %v575 = vpop.f32.mrf.mxu0
        %v576 = vpop.f32.mrf.mxu0
        %v577 = vadd.f32 0.0, %v576
        %v578 = vpop.f32.mrf.mxu0
        %579 = vmatprep.mubr.bf16.mxu0 0
        %580 = vmatmul.mubr.bf16.gmra.mxu0 %v470
        %v581 = vpop.f32.mrf.mxu0
        %v582 = vadd.f32 0.0, %v581
        %v583 = vpop.f32.mrf.mxu0
        %v584 = vpop.f32.mrf.mxu0
        %v585 = vadd.f32 0.0, %v584
        %v586 = vpop.f32.mrf.mxu0
        %587 = vdwg.mxu0
        %v588 = vadd.f32 %v443, %v558
        %v589 = vadd.f32 %v444, %v561
        %v590 = vadd.f32 %v445, %v566
        %v591 = vadd.f32 %v446, %v569
        %v592 = vadd.f32 %v447, %v574
        %v593 = vadd.f32 %v448, %v577
        %v594 = vadd.f32 %v449, %v582
        %v595 = vadd.f32 %v450, %v585
        %596 = vst [vmem:[#allocation2] sm:$0xff] %v588
        %597 = vst [vmem:[#allocation2 + $0x8] sm:$0xff] %v589
        %598 = vst [vmem:[#allocation2 + $0x10] sm:$0xff] %v590
        %599 = vst [vmem:[#allocation2 + $0x18] sm:$0xff] %v591
        %600 = vst [vmem:[#allocation2 + $0x20] sm:$0xff] %v592
        %601 = vst [vmem:[#allocation2 + $0x28] sm:$0xff] %v593
        %602 = vst [vmem:[#allocation2 + $0x30] sm:$0xff] %v594
        %603 = vst [vmem:[#allocation2 + $0x38] sm:$0xff] %v595
      $region48: #{_gnn_forward_device.6} parent=39 // pred_fallthru
        _
      // Predicated region
      $region49: #{_gnn_forward_device.6} parent=39 // pred_check
        %p604 = pneg %p382
      $region50: #{_gnn_forward_device.6} parent=39 // pred_check_branch
        %606 = sbr.rel (%p604) target = $region52
      $region51: #{_gnn_forward_device.6} parent=39 // pred_region
        %v607 = vld [vmem:[%s367] sm:$0xf]
        %v608 = vld [vmem:[%s367 + $0x4] sm:$0xf]
        %v609 = vld [vmem:[%s367 + $0x8] sm:$0xf]
        %v610 = vld [vmem:[%s367 + $0xc] sm:$0xf]
        %v611 = vld [vmem:[%s367 + $0x10] sm:$0xf]
        %v612 = vld [vmem:[%s367 + $0x14] sm:$0xf]
        %v613 = vld [vmem:[%s367 + $0x18] sm:$0xf]
        %v614 = vld [vmem:[%s367 + $0x1c] sm:$0xf]
        %v615 = vunpack.c.l.bf16 %v607
        %v616 = vunpack.c.l.bf16 %v608
        %v617 = vunpack.c.l.bf16 %v609
        %v618 = vunpack.c.l.bf16 %v610
        %v619 = vunpack.c.l.bf16 %v611
        %v620 = vunpack.c.l.bf16 %v612
        %v621 = vunpack.c.l.bf16 %v613
        %v622 = vunpack.c.l.bf16 %v614
        %v623 = vld [vmem:[#allocation2] sm:$0xff]
        %v624 = vld [vmem:[#allocation2 + $0x8] sm:$0xff]
        %v625 = vld [vmem:[#allocation2 + $0x10] sm:$0xff]
        %v626 = vld [vmem:[#allocation2 + $0x18] sm:$0xff]
        %v627 = vld [vmem:[#allocation2 + $0x20] sm:$0xff]
        %v628 = vld [vmem:[#allocation2 + $0x28] sm:$0xff]
        %v629 = vld [vmem:[#allocation2 + $0x30] sm:$0xff]
        %v630 = vld [vmem:[#allocation2 + $0x38] sm:$0xff]
        %v631 = vadd.f32 %v615, %v623
        %v632 = vadd.f32 %v616, %v624
        %v633 = vadd.f32 %v617, %v625
        %v634 = vadd.f32 %v618, %v626
        %v635 = vadd.f32 %v619, %v627
        %v636 = vadd.f32 %v620, %v628
        %v637 = vadd.f32 %v621, %v629
        %v638 = vadd.f32 %v622, %v630
        %v639 = vpack.c.bf16 %v632, %v631
        %v640 = vpack.c.bf16 %v634, %v633
        %v641 = vpack.c.bf16 %v636, %v635
        %v642 = vpack.c.bf16 %v638, %v637
        %v643 = vld [vmem:[%s5] sm:$0xf]
        %v644 = vld [vmem:[%s5 + $0x4] sm:$0xf]
        %v645 = vld [vmem:[%s5 + $0x8] sm:$0xf]
        %v646 = vld [vmem:[%s5 + $0xc] sm:$0xf]
        %v647 = vld [vmem:[%s5 + $0x10] sm:$0xf]
        %v648 = vld [vmem:[%s5 + $0x14] sm:$0xf]
        %v649 = vld [vmem:[%s5 + $0x18] sm:$0xf]
        %v650 = vld [vmem:[%s5 + $0x1c] sm:$0xf]
        %v651 = vld [vmem:[%s5 + $0x20] sm:$0xf]
        %v652 = vld [vmem:[%s5 + $0x24] sm:$0xf]
        %v653 = vld [vmem:[%s5 + $0x28] sm:$0xf]
        %v654 = vld [vmem:[%s5 + $0x2c] sm:$0xf]
        %v655 = vld [vmem:[%s5 + $0x30] sm:$0xf]
        %v656 = vld [vmem:[%s5 + $0x34] sm:$0xf]
        %v657 = vld [vmem:[%s5 + $0x38] sm:$0xf]
        %v658 = vld [vmem:[%s5 + $0x3c] sm:$0xf]
        %v659 = vld [vmem:[%s6] sm:$0x1]
        %v661 = vlaneseq
        %v662 = vshrl.u32 %v661, 7
        %v663 = vsub.s32 0, %v662
        %v664 = vrot.slane %v659, %v663
        %v682 = vunpack.c.l.b16 %v643
        %v683 = vunpack.c.l.b16 %v644
        %v684 = vunpack.c.l.b16 %v645
        %v685 = vunpack.c.l.b16 %v646
        %v686 = vunpack.c.l.b16 %v647
        %v687 = vunpack.c.l.b16 %v648
        %v688 = vunpack.c.l.b16 %v649
        %v689 = vunpack.c.l.b16 %v650
        %v690 = vunpack.c.l.b16 %v651
        %v691 = vunpack.c.l.b16 %v652
        %v692 = vunpack.c.l.b16 %v653
        %v693 = vunpack.c.l.b16 %v654
        %v694 = vunpack.c.l.b16 %v655
        %v695 = vunpack.c.l.b16 %v656
        %v696 = vunpack.c.l.b16 %v657
        %v697 = vunpack.c.l.b16 %v658
        %v698 = vpack.c.b16 %v683, %v682
        %v699 = vpack.c.b16 %v685, %v684
        %v700 = vpack.c.b16 %v687, %v686
        %v701 = vpack.c.b16 %v689, %v688
        %v702 = vpack.c.b16 %v691, %v690
        %v703 = vpack.c.b16 %v693, %v692
        %v704 = vpack.c.b16 %v695, %v694
        %v705 = vpack.c.b16 %v697, %v696
        %714 = vmatprep.subr.bf16.mxu0 0
        %715 = vmatpush1.bf16.msra.mxu0 %v705
        %716 = vmatprep.subr.bf16.mxu0 0
        %717 = vmatpush1.bf16.msra.mxu0 %v704
        %718 = vmatprep.subr.bf16.mxu0 0
        %719 = vmatpush1.bf16.msra.mxu0 %v703
        %720 = vmatprep.subr.bf16.mxu0 0
        %721 = vmatpush1.bf16.msra.mxu0 %v702
        %722 = vmatprep.subr.bf16.mxu0 0
        %723 = vmatpush1.bf16.msra.mxu0 %v701
        %724 = vmatprep.subr.bf16.mxu0 0
        %725 = vmatpush1.bf16.msra.mxu0 %v700
        %726 = vmatprep.subr.bf16.mxu0 0
        %727 = vmatpush1.bf16.msra.mxu0 %v699
        %728 = vmatprep.subr.bf16.mxu0 0
        %729 = vmatpush1.bf16.msra.mxu0 %v698
        %730 = vmatprep.subr.bf16.mxu0 0
        %731 = vmatpush2.bf16.msra.mxu0 0
        %732 = vmatprep.subr.bf16.mxu0 0
        %733 = vmatpush2.bf16.msra.mxu0 0
        %734 = vmatprep.subr.bf16.mxu0 0
        %735 = vmatpush2.bf16.msra.mxu0 0
        %736 = vmatprep.subr.bf16.mxu0 0
        %737 = vmatpush2.bf16.msra.mxu0 0
        %738 = vmatprep.subr.bf16.mxu0 0
        %739 = vmatpush2.bf16.msra.mxu0 0
        %740 = vmatprep.subr.bf16.mxu0 0
        %741 = vmatpush2.bf16.msra.mxu0 0
        %742 = vmatprep.subr.bf16.mxu0 0
        %743 = vmatpush2.bf16.msra.mxu0 0
        %744 = vmatprep.subr.bf16.mxu0 0
        %745 = vmatpush2.bf16.msra.mxu0 0
        %746 = vmatprep.mubr.bf16.mxu0 0
        %747 = vmatmul.mubr.bf16.gmra.mxu0 %v639
        %v748 = vpop.f32.mrf.mxu0
        %v749 = vadd.f32 %v664, %v748
        %v750 = vpop.f32.mrf.mxu0
        %v751 = vpop.f32.mrf.mxu0
        %v752 = vadd.f32 %v664, %v751
        %v753 = vpop.f32.mrf.mxu0
        %754 = vmatprep.mubr.bf16.mxu0 0
        %755 = vmatmul.mubr.bf16.gmra.mxu0 %v640
        %v756 = vpop.f32.mrf.mxu0
        %v757 = vadd.f32 %v664, %v756
        %v758 = vpop.f32.mrf.mxu0
        %v759 = vpop.f32.mrf.mxu0
        %v760 = vadd.f32 %v664, %v759
        %v761 = vpop.f32.mrf.mxu0
        %762 = vmatprep.mubr.bf16.mxu0 0
        %763 = vmatmul.mubr.bf16.gmra.mxu0 %v641
        %v764 = vpop.f32.mrf.mxu0
        %v765 = vadd.f32 %v664, %v764
        %v766 = vpop.f32.mrf.mxu0
        %v767 = vpop.f32.mrf.mxu0
        %v768 = vadd.f32 %v664, %v767
        %v769 = vpop.f32.mrf.mxu0
        %770 = vmatprep.mubr.bf16.mxu0 0
        %771 = vmatmul.mubr.bf16.gmra.mxu0 %v642
        %v772 = vpop.f32.mrf.mxu0
        %v773 = vadd.f32 %v664, %v772
        %v774 = vpop.f32.mrf.mxu0
        %v775 = vpop.f32.mrf.mxu0
        %v776 = vadd.f32 %v664, %v775
        %v777 = vpop.f32.mrf.mxu0
        %778 = vdwg.mxu0
        %v779 = vpack.c.bf16 %v752, %v749
        %v780 = vpack.c.bf16 %v760, %v757
        %v781 = vpack.c.bf16 %v768, %v765
        %v782 = vpack.c.bf16 %v776, %v773
        %v787 = vunpack.c.l.b16 %v779
        %v788 = vunpack.c.h.b16 %v779
        %v789 = vunpack.c.l.b16 %v780
        %v790 = vunpack.c.h.b16 %v780
        %v791 = vunpack.c.l.b16 %v781
        %v792 = vunpack.c.h.b16 %v781
        %v793 = vunpack.c.l.b16 %v782
        %v794 = vunpack.c.h.b16 %v782
        %v795 = vpack.c.b16 %v787, %v787
        %v796 = vpack.c.b16 %v788, %v788
        %v797 = vpack.c.b16 %v789, %v789
        %v798 = vpack.c.b16 %v790, %v790
        %v799 = vpack.c.b16 %v791, %v791
        %v800 = vpack.c.b16 %v792, %v792
        %v801 = vpack.c.b16 %v793, %v793
        %v802 = vpack.c.b16 %v794, %v794
        %811 = vst [vmem:[%s373] sm:$0xf] %v795
        %812 = vst [vmem:[%s373 + $0x4] sm:$0xf] %v796
        %813 = vst [vmem:[%s373 + $0x8] sm:$0xf] %v797
        %814 = vst [vmem:[%s373 + $0xc] sm:$0xf] %v798
        %815 = vst [vmem:[%s373 + $0x10] sm:$0xf] %v799
        %816 = vst [vmem:[%s373 + $0x14] sm:$0xf] %v800
        %817 = vst [vmem:[%s373 + $0x18] sm:$0xf] %v801
        %818 = vst [vmem:[%s373 + $0x1c] sm:$0xf] %v802
        %v819 = vlaneseq
        %v820 = vshrl.u32 %v819, 7
        %v821 = vadd.s32 %v820, 8
        %v822 = vadd.s32 %v820, 16
        %v823 = vadd.s32 %v820, 24
        %v824 = vadd.s32 %v820, 32
        %v825 = vadd.s32 %v820, 40
        %v826 = vadd.s32 %v820, 48
        %v827 = vadd.s32 %v820, 56
        %v828 = vstv %s380
        %v829 = vadd.s32 %v820, %v828
        %v830 = vadd.s32 %v821, %v828
        %v831 = vadd.s32 %v822, %v828
        %v832 = vadd.s32 %v823, %v828
        %v833 = vadd.s32 %v824, %v828
        %v834 = vadd.s32 %v825, %v828
        %v835 = vadd.s32 %v826, %v828
        %v836 = vadd.s32 %v827, %v828
        %vm837 = vcmp.lt.s32.totalorder %v829, 12
        %vm838 = vcmp.lt.s32.totalorder %v830, 12
        %vm839 = vcmp.lt.s32.totalorder %v831, 12
        %vm840 = vcmp.lt.s32.totalorder %v832, 12
        %vm841 = vcmp.lt.s32.totalorder %v833, 12
        %vm842 = vcmp.lt.s32.totalorder %v834, 12
        %vm843 = vcmp.lt.s32.totalorder %v835, 12
        %vm844 = vcmp.lt.s32.totalorder %v836, 12
        %v845 = vsel %vm837, 1, 0
        %v846 = vsel %vm838, 1, 0
        %v847 = vsel %vm839, 1, 0
        %v848 = vsel %vm840, 1, 0
        %v849 = vsel %vm841, 1, 0
        %v850 = vsel %vm842, 1, 0
        %v851 = vsel %vm843, 1, 0
        %v852 = vsel %vm844, 1, 0
        %v853 = vcvt.s32.f32 %v845
        %v854 = vcvt.s32.f32 %v846
        %v855 = vcvt.s32.f32 %v847
        %v856 = vcvt.s32.f32 %v848
        %v857 = vcvt.s32.f32 %v849
        %v858 = vcvt.s32.f32 %v850
        %v859 = vcvt.s32.f32 %v851
        %v860 = vcvt.s32.f32 %v852
        %v861 = vmul.f32 %v749, %v853
        %v862 = vmul.f32 %v752, %v854
        %v863 = vmul.f32 %v757, %v855
        %v864 = vmul.f32 %v760, %v856
        %v865 = vmul.f32 %v765, %v857
        %v866 = vmul.f32 %v768, %v858
        %v867 = vmul.f32 %v773, %v859
        %v868 = vmul.f32 %v776, %v860
        %v869 = vadd.f32 %v861, %v862
        %v870 = vadd.f32 %v869, %v863
        %v871 = vadd.f32 %v870, %v864
        %v872 = vadd.f32 %v871, %v865
        %v873 = vadd.f32 %v872, %v866
        %v874 = vadd.f32 %v873, %v867
        %v875 = vadd.f32 %v874, %v868
        %v876 = vrot.slane %v875, 4
        %v877 = vadd.f32 %v875, %v876
        %v878 = vrot.slane %v877, 2
        %v879 = vadd.f32 %v877, %v878
        %v880 = vrot.slane %v879, 1
        %v881 = vadd.f32 %v879, %v880
        %882 = vst [vmem:[%s378] sm:$0x1] %v881
        %v883 = vmul.f32 %v861, %v749
        %v884 = vmul.f32 %v862, %v752
        %v885 = vmul.f32 %v863, %v757
        %v886 = vmul.f32 %v864, %v760
        %v887 = vmul.f32 %v865, %v765
        %v888 = vmul.f32 %v866, %v768
        %v889 = vmul.f32 %v867, %v773
        %v890 = vmul.f32 %v868, %v776
        %v891 = vadd.f32 %v883, %v884
        %v892 = vadd.f32 %v891, %v885
        %v893 = vadd.f32 %v892, %v886
        %v894 = vadd.f32 %v893, %v887
        %v895 = vadd.f32 %v894, %v888
        %v896 = vadd.f32 %v895, %v889
        %v897 = vadd.f32 %v896, %v890
        %v898 = vrot.slane %v897, 4
        %v899 = vadd.f32 %v897, %v898
        %v900 = vrot.slane %v899, 2
        %v901 = vadd.f32 %v899, %v900
        %v902 = vrot.slane %v901, 1
        %v903 = vadd.f32 %v901, %v902
        %904 = vst [vmem:[%s378 + $0x1] sm:$0x1] %v903
      $region52: #{_gnn_forward_device.6} parent=39 // pred_fallthru
        _
      %s905 = smul.u32 8, %s34
      %p906 = scmp.lt.s32.totalorder %s905, 15
      %s907 = scalar_select %p906, %s905, 15
      %s908 = smul.addr %s907, 4
      %s909 = scalar_lea.vmem %s7, %s908
      %p910 = scmp.lt.s32.totalorder %s34, 1
      %s911 = scalar_select %p910, %s34, 1
      %s912 = smul.addr %s911, 8
      %s913 = scalar_lea.vmem %s8, %s912
      // Predicated region
      $region53: #{_gnn_forward_device.6} parent=39 // pred_check
        %p914 = pneg %p193
      $region54: #{_gnn_forward_device.6} parent=39 // pred_check_branch
        %916 = sbr.rel (%p914) target = $region56
      $region55: #{_gnn_forward_device.6} parent=39 // pred_region
        %s917 = smul.u32 8, %s34
      $region56: #{_gnn_forward_device.6} parent=39 // pred_fallthru
        _
      // Predicated region
      $region57: #{_gnn_forward_device.6} parent=39 // pred_check
        %p918 = pneg %p219
      $region58: #{_gnn_forward_device.6} parent=39 // pred_check_branch
        %920 = sbr.rel (%p918) target = $region60
      $region59: #{_gnn_forward_device.6} parent=39 // pred_region
        _
      $region60: #{_gnn_forward_device.6} parent=39 // pred_fallthru
        _
    $region40: #{_gnn_forward_device.6} parent=5 // pred_fallthru
      _
    %p921 = scmp.le.s32.totalorder 2, %s25
    // Predicated region
    $region61: #{_gnn_forward_device.6} parent=5 // pred_check
      %p922 = pneg %p921
    $region62: #{_gnn_forward_device.6} parent=5 // pred_check_branch
      %924 = sbr.rel (%p922) target = $region64
    $region63: #{_gnn_forward_device.6} parent=5 // pred_region
      %s925 = ssub.s32 %s25, 2
      // Predicated region
      $region65: #{_gnn_forward_device.6} parent=63 // pred_check
        %p926 = pneg %p199
      $region66: #{_gnn_forward_device.6} parent=63 // pred_check_branch
        %928 = sbr.rel (%p926) target = $region68
      $region67: #{_gnn_forward_device.6} parent=63 // pred_region
        %s929 = smul.u32 8, %s36
        %p930 = scmp.lt.s32.totalorder %s929, 15
        %s931 = scalar_select %p930, %s929, 15
        %s932 = smul.addr %s931, 4
        %s933 = scalar_lea.vmem %s7, %s932
      $region68: #{_gnn_forward_device.6} parent=63 // pred_fallthru
        _
      // Predicated region
      $region69: #{_gnn_forward_device.6} parent=63 // pred_check
        %p934 = pneg %p225
      $region70: #{_gnn_forward_device.6} parent=63 // pred_check_branch
        %936 = sbr.rel (%p934) target = $region72
      $region71: #{_gnn_forward_device.6} parent=63 // pred_region
        %p937 = scmp.lt.s32.totalorder %s36, 1
        %s938 = scalar_select %p937, %s36, 1
        %s939 = smul.addr %s938, 8
        %s940 = scalar_lea.vmem %s8, %s939
      $region72: #{_gnn_forward_device.6} parent=63 // pred_fallthru
        _
    $region64: #{_gnn_forward_device.6} parent=5 // pred_fallthru
      _
  $region6: #{_gnn_forward_device.6} parent=0 // loop_footer
    %s29 = sadd.s32 1, %s25
  $region7: #{_gnn_forward_device.6} parent=0 // loop_footer_branch
    %24 = sbr.rel target = $region3
  $region8: #{_gnn_forward_device.6} parent=0 // loop_exit
    _

// kernel: _gnn_forward_device.7
$region0: #{_gnn_forward_device.7}
  #allocation0 [shape = 'u32[]', space=smem, size = 0x4, offset = 0x4, fixed_abs, tag = 'smem constant byte address 0x4 - core index']
  #allocation1 [shape = 'u32[144,128]{1,0:T(1,128)}', space=vmem, size = 0x12000, scoped, tag = 'internal scratch']
  %s0 = inlined_call_operand.vmem [shape: bf16[128,128], index: 0, kind: input, shape index: {}]
  %s1 = inlined_call_operand.vmem [shape: f32[1,128], index: 1, kind: input, shape index: {}]
  %s2 = inlined_call_operand.vmem [shape: f32[1,128], index: 2, kind: input, shape index: {}]
  %s3 = inlined_call_operand.vmem [shape: bf16[128,128], index: 3, kind: input, shape index: {}]
  %s4 = inlined_call_operand.vmem [shape: f32[1,128], index: 4, kind: input, shape index: {}]
  %s5 = inlined_call_operand.vmem [shape: bf16[128,128], index: 5, kind: output, shape index: {}]
  %s6 = sld [smem:[#allocation0]]
  $region53: #{_gnn_forward_device.7} parent=0
    _
  %s8 = ssub.s32 1, %s6
  %s9 = scalar_select 0, %s8, %s6
  loop: start=0, step=1, limit=4
  $region2: #{_gnn_forward_device.7} parent=0 // loop_pre_header
    _
  $region3: #{_gnn_forward_device.7} parent=0 // loop_header
    %s11 = sphi 0, %s15
    %p12 = scmp.ge.s32.totalorder %s11, 4
    %s21 = sphi 0, %s23
    %s24 = sphi 0, %s21
    %s25 = sphi 0, %s24
    %s41 = sphi 0, %s25
    %s45 = sphi 0, %s45
    %s47 = sphi 0, %s45
    %s48 = sphi 0, %s47
    %s62 = sphi 0, %s48
    %s66 = sphi 0, %s66
    %s68 = sphi 0, %s66
    %s69 = sphi 0, %s68
    %s83 = sphi 0, %s69
    %s87 = sphi 0, %s87
    %s89 = sphi 0, %s87
    %s90 = sphi 0, %s89
    %s104 = sphi 0, %s90
    %s108 = sphi 0, %s108
    %s110 = sphi 0, %s108
    %s111 = sphi 0, %s110
    %s125 = sphi 0, %s111
    %s131 = sphi 0, %s133
    %s134 = sphi 0, %s131
    %s135 = sphi 0, %s134
    %s151 = sphi 0, %s135
  $region4: #{_gnn_forward_device.7} parent=0 // loop_header_branch
    %14 = sbr.rel (%p12) target = $region8
  $region5: #{_gnn_forward_device.7} parent=0 // loop_body
    %s16 = ssub.s32 %s11, 1
    %s17 = ssub.s32 %s11, 2
    %s18 = sadd.s32 %s11, 1
    %s19 = ssub.s32 %s11, %s18
    %p20 = scmp.eq.s32.totalorder %s19, 0
    %s22 = sadd.s32 %s21, 1
    %s23 = scalar_select %p20, %s21, %s22
    %p26 = pneg %p20
    %p27 = scmp.eq.s32.totalorder %s11, 1
    %p28 = por %p26, %p27
    %p29 = scmp.ne.s32.totalorder %s21, %s24
    %p30 = scmp.eq.s32.totalorder %s11, 0
    %p31 = por %p29, %p30
    %p32 = scmp.ne.s32.totalorder %s21, %s24
    %p33 = scmp.eq.s32.totalorder %s16, 1
    %p34 = por %p32, %p33
    %p35 = scmp.ne.s32.totalorder %s24, %s25
    %p36 = scmp.eq.s32.totalorder %s16, 0
    %p37 = por %p35, %p36
    %p38 = scmp.ne.s32.totalorder %s24, %s25
    %p39 = scmp.eq.s32.totalorder %s17, 1
    %p40 = por %p38, %p39
    %p42 = scmp.ne.s32.totalorder %s25, %s41
    %p43 = scmp.eq.s32.totalorder %s17, 0
    %p44 = por %p42, %p43
    %s46 = sadd.s32 %s45, 1
    %p49 = scmp.eq.s32.totalorder %s11, 1
    %p50 = scmp.ne.s32.totalorder %s45, %s47
    %p51 = scmp.eq.s32.totalorder %s11, 0
    %p52 = por %p50, %p51
    %p53 = scmp.ne.s32.totalorder %s45, %s47
    %p54 = scmp.eq.s32.totalorder %s16, 1
    %p55 = por %p53, %p54
    %p56 = scmp.ne.s32.totalorder %s47, %s48
    %p57 = scmp.eq.s32.totalorder %s16, 0
    %p58 = por %p56, %p57
    %p59 = scmp.ne.s32.totalorder %s47, %s48
    %p60 = scmp.eq.s32.totalorder %s17, 1
    %p61 = por %p59, %p60
    %p63 = scmp.ne.s32.totalorder %s48, %s62
    %p64 = scmp.eq.s32.totalorder %s17, 0
    %p65 = por %p63, %p64
    %s67 = sadd.s32 %s66, 1
    %p70 = scmp.eq.s32.totalorder %s11, 1
    %p71 = scmp.ne.s32.totalorder %s66, %s68
    %p72 = scmp.eq.s32.totalorder %s11, 0
    %p73 = por %p71, %p72
    %p74 = scmp.ne.s32.totalorder %s66, %s68
    %p75 = scmp.eq.s32.totalorder %s16, 1
    %p76 = por %p74, %p75
    %p77 = scmp.ne.s32.totalorder %s68, %s69
    %p78 = scmp.eq.s32.totalorder %s16, 0
    %p79 = por %p77, %p78
    %p80 = scmp.ne.s32.totalorder %s68, %s69
    %p81 = scmp.eq.s32.totalorder %s17, 1
    %p82 = por %p80, %p81
    %p84 = scmp.ne.s32.totalorder %s69, %s83
    %p85 = scmp.eq.s32.totalorder %s17, 0
    %p86 = por %p84, %p85
    %s88 = sadd.s32 %s87, 1
    %p91 = scmp.eq.s32.totalorder %s11, 1
    %p92 = scmp.ne.s32.totalorder %s87, %s89
    %p93 = scmp.eq.s32.totalorder %s11, 0
    %p94 = por %p92, %p93
    %p95 = scmp.ne.s32.totalorder %s87, %s89
    %p96 = scmp.eq.s32.totalorder %s16, 1
    %p97 = por %p95, %p96
    %p98 = scmp.ne.s32.totalorder %s89, %s90
    %p99 = scmp.eq.s32.totalorder %s16, 0
    %p100 = por %p98, %p99
    %p101 = scmp.ne.s32.totalorder %s89, %s90
    %p102 = scmp.eq.s32.totalorder %s17, 1
    %p103 = por %p101, %p102
    %p105 = scmp.ne.s32.totalorder %s90, %s104
    %p106 = scmp.eq.s32.totalorder %s17, 0
    %p107 = por %p105, %p106
    %s109 = sadd.s32 %s108, 1
    %p112 = scmp.eq.s32.totalorder %s11, 1
    %p113 = scmp.ne.s32.totalorder %s108, %s110
    %p114 = scmp.eq.s32.totalorder %s11, 0
    %p115 = por %p113, %p114
    %p116 = scmp.ne.s32.totalorder %s108, %s110
    %p117 = scmp.eq.s32.totalorder %s16, 1
    %p118 = por %p116, %p117
    %p119 = scmp.ne.s32.totalorder %s110, %s111
    %p120 = scmp.eq.s32.totalorder %s16, 0
    %p121 = por %p119, %p120
    %p122 = scmp.ne.s32.totalorder %s110, %s111
    %p123 = scmp.eq.s32.totalorder %s17, 1
    %p124 = por %p122, %p123
    %p126 = scmp.ne.s32.totalorder %s111, %s125
    %p127 = scmp.eq.s32.totalorder %s17, 0
    %p128 = por %p126, %p127
    %s129 = ssub.s32 %s11, %s18
    %p130 = scmp.eq.s32.totalorder %s129, 0
    %s132 = sadd.s32 %s131, 1
    %s133 = scalar_select %p130, %s131, %s132
    %p136 = pneg %p130
    %p137 = scmp.eq.s32.totalorder %s11, 1
    %p138 = por %p136, %p137
    %p139 = scmp.ne.s32.totalorder %s131, %s134
    %p140 = scmp.eq.s32.totalorder %s11, 0
    %p141 = por %p139, %p140
    %p142 = scmp.ne.s32.totalorder %s131, %s134
    %p143 = scmp.eq.s32.totalorder %s16, 1
    %p144 = por %p142, %p143
    %p145 = scmp.ne.s32.totalorder %s134, %s135
    %p146 = scmp.eq.s32.totalorder %s16, 0
    %p147 = por %p145, %p146
    %p148 = scmp.ne.s32.totalorder %s134, %s135
    %p149 = scmp.eq.s32.totalorder %s17, 1
    %p150 = por %p148, %p149
    %p152 = scmp.ne.s32.totalorder %s135, %s151
    %p153 = scmp.eq.s32.totalorder %s17, 0
    %p154 = por %p152, %p153
    %p155 = scmp.le.s32.totalorder 1, %s11
    %p156 = scmp.lt.s32.totalorder %s11, 3
    %p157 = pnand %p155, %p156
    %p158 = pneg %p157
    // Predicated region
    $region9: #{_gnn_forward_device.7} parent=5 // pred_check
      _
    $region10: #{_gnn_forward_device.7} parent=5 // pred_check_branch
      %160 = sbr.rel (%p157) target = $region12
    $region11: #{_gnn_forward_device.7} parent=5 // pred_region
      %s161 = ssub.s32 %s11, 1
      // Predicated region
      $region13: #{_gnn_forward_device.7} parent=11 // pred_check
        %p162 = pneg %p58
      $region14: #{_gnn_forward_device.7} parent=11 // pred_check_branch
        %164 = sbr.rel (%p162) target = $region16
      $region15: #{_gnn_forward_device.7} parent=11 // pred_region
        _
      $region16: #{_gnn_forward_device.7} parent=11 // pred_fallthru
        _
      // Predicated region
      $region17: #{_gnn_forward_device.7} parent=11 // pred_check
        %p165 = pneg %p79
      $region18: #{_gnn_forward_device.7} parent=11 // pred_check_branch
        %167 = sbr.rel (%p165) target = $region20
      $region19: #{_gnn_forward_device.7} parent=11 // pred_region
        _
      $region20: #{_gnn_forward_device.7} parent=11 // pred_fallthru
        _
      // Predicated region
      $region21: #{_gnn_forward_device.7} parent=11 // pred_check
        %p168 = pneg %p100
      $region22: #{_gnn_forward_device.7} parent=11 // pred_check_branch
        %170 = sbr.rel (%p168) target = $region24
      $region23: #{_gnn_forward_device.7} parent=11 // pred_region
        _
      $region24: #{_gnn_forward_device.7} parent=11 // pred_fallthru
        _
      // Predicated region
      $region25: #{_gnn_forward_device.7} parent=11 // pred_check
        %p171 = pneg %p121
      $region26: #{_gnn_forward_device.7} parent=11 // pred_check_branch
        %173 = sbr.rel (%p171) target = $region28
      $region27: #{_gnn_forward_device.7} parent=11 // pred_region
        _
      $region28: #{_gnn_forward_device.7} parent=11 // pred_fallthru
        _
    $region12: #{_gnn_forward_device.7} parent=5 // pred_fallthru
      _
    %p174 = scmp.lt.s32.totalorder %s11, 2
    // Predicated region
    $region29: #{_gnn_forward_device.7} parent=5 // pred_check
      %p175 = pneg %p174
    $region30: #{_gnn_forward_device.7} parent=5 // pred_check_branch
      %177 = sbr.rel (%p175) target = $region32
    $region31: #{_gnn_forward_device.7} parent=5 // pred_region
      // Predicated region
      $region33: #{_gnn_forward_device.7} parent=31 // pred_check
        %p178 = pneg %p31
      $region34: #{_gnn_forward_device.7} parent=31 // pred_check_branch
        %180 = sbr.rel (%p178) target = $region36
      $region35: #{_gnn_forward_device.7} parent=31 // pred_region
        %s181 = smul.u32 8, %s11
        %p182 = scmp.lt.s32.totalorder %s181, 15
        %s183 = scalar_select %p182, %s181, 15
        %s184 = smul.addr %s183, 4
        %s185 = scalar_lea.vmem %s0, %s184
        %s186 = smul.u32 8, %s11
      $region36: #{_gnn_forward_device.7} parent=31 // pred_fallthru
        _
    $region32: #{_gnn_forward_device.7} parent=5 // pred_fallthru
      _
    %p187 = scmp.le.s32.totalorder 1, %s11
    %p188 = scmp.lt.s32.totalorder %s11, 3
    %p189 = pnand %p187, %p188
    %p190 = pneg %p189
    // Predicated region
    $region37: #{_gnn_forward_device.7} parent=5 // pred_check
      _
    $region38: #{_gnn_forward_device.7} parent=5 // pred_check_branch
      %192 = sbr.rel (%p189) target = $region40
    $region39: #{_gnn_forward_device.7} parent=5 // pred_region
      %s193 = ssub.s32 %s11, 1
      %s194 = smul.u32 8, %s16
      %p195 = scmp.lt.s32.totalorder %s194, 15
      %s196 = scalar_select %p195, %s194, 15
      %s197 = smul.addr %s196, 4
      %s198 = scalar_lea.vmem %s0, %s197
      %p199 = pneg %p37
      %p200 = pneg %p34
      %p201 = pneg %p58
      %p202 = pneg %p55
      %p203 = pneg %p79
      %p204 = pneg %p76
      %p205 = pneg %p100
      %p206 = pneg %p97
      %p207 = pneg %p121
      %p208 = pneg %p118
      %p209 = pneg %p147
      %p210 = pneg %p144
      %s211 = smul.u32 8, %s16
      %p212 = scmp.lt.s32.totalorder %s211, 15
      %s213 = scalar_select %p212, %s211, 15
      %s214 = smul.addr %s213, 4
      %s215 = scalar_lea.vmem %s5, %s214
      %s216 = smul.u32 8, %s16
      %p217 = scmp.lt.s32.totalorder %s216, 15
      %s218 = scalar_select %p217, %s216, 15
      %s219 = smul.addr %s218, 4
      %s220 = scalar_lea.vmem %s0, %s219
      %s221 = smul.u32 8, %s16
      %s222 = smul.u32 8, %s16
      %p223 = scmp.lt.s32.totalorder %s222, 15
      %s224 = scalar_select %p223, %s222, 15
      %s225 = smul.addr %s224, 4
      %s226 = scalar_lea.vmem %s5, %s225
      %s227 = smul.u32 8, %s16
      %v229 = vld [vmem:[%s220] sm:$0xf]
      %v230 = vld [vmem:[%s220 + $0x4] sm:$0xf]
      %v231 = vld [vmem:[%s220 + $0x8] sm:$0xf]
      %v232 = vld [vmem:[%s220 + $0xc] sm:$0xf]
      %v233 = vld [vmem:[%s220 + $0x10] sm:$0xf]
      %v234 = vld [vmem:[%s220 + $0x14] sm:$0xf]
      %v235 = vld [vmem:[%s220 + $0x18] sm:$0xf]
      %v236 = vld [vmem:[%s220 + $0x1c] sm:$0xf]
      %v237 = vunpack.c.l.bf16 %v229
      %v238 = vunpack.c.l.bf16 %v230
      %v239 = vunpack.c.l.bf16 %v231
      %v240 = vunpack.c.l.bf16 %v232
      %v241 = vunpack.c.l.bf16 %v233
      %v242 = vunpack.c.l.bf16 %v234
      %v243 = vunpack.c.l.bf16 %v235
      %v244 = vunpack.c.l.bf16 %v236
      %v245 = vld [vmem:[%s1] sm:$0x1]
      %v247 = vlaneseq
      %v248 = vshrl.u32 %v247, 7
      %v249 = vsub.s32 0, %v248
      %v250 = vrot.slane %v245, %v249
      %v252 = vmul.f32 %v237, %v250
      %v253 = vmul.f32 %v238, %v250
      %v254 = vmul.f32 %v239, %v250
      %v255 = vmul.f32 %v240, %v250
      %v256 = vmul.f32 %v241, %v250
      %v257 = vmul.f32 %v242, %v250
      %v258 = vmul.f32 %v243, %v250
      %v259 = vmul.f32 %v244, %v250
      %v260 = vld [vmem:[%s2] sm:$0x1]
      %v262 = vlaneseq
      %v263 = vshrl.u32 %v262, 7
      %v264 = vsub.s32 0, %v263
      %v265 = vrot.slane %v260, %v264
      %v267 = vadd.f32 %v252, %v265
      %v268 = vadd.f32 %v253, %v265
      %v269 = vadd.f32 %v254, %v265
      %v270 = vadd.f32 %v255, %v265
      %v271 = vadd.f32 %v256, %v265
      %v272 = vadd.f32 %v257, %v265
      %v273 = vadd.f32 %v258, %v265
      %v274 = vadd.f32 %v259, %v265
      %v275 = vmax.f32 %v267, 0.0
      %v276 = vmax.f32 %v268, 0.0
      %v277 = vmax.f32 %v269, 0.0
      %v278 = vmax.f32 %v270, 0.0
      %v279 = vmax.f32 %v271, 0.0
      %v280 = vmax.f32 %v272, 0.0
      %v281 = vmax.f32 %v273, 0.0
      %v282 = vmax.f32 %v274, 0.0
      %v283 = vpack.c.bf16 %v276, %v275
      %v284 = vpack.c.bf16 %v278, %v277
      %v285 = vpack.c.bf16 %v280, %v279
      %v286 = vpack.c.bf16 %v282, %v281
      %v287 = vld [vmem:[%s3] sm:$0xf]
      %v288 = vld [vmem:[%s3 + $0x4] sm:$0xf]
      %v289 = vld [vmem:[%s3 + $0x8] sm:$0xf]
      %v290 = vld [vmem:[%s3 + $0xc] sm:$0xf]
      %v291 = vld [vmem:[%s3 + $0x10] sm:$0xf]
      %v292 = vld [vmem:[%s3 + $0x14] sm:$0xf]
      %v293 = vld [vmem:[%s3 + $0x18] sm:$0xf]
      %v294 = vld [vmem:[%s3 + $0x1c] sm:$0xf]
      %v295 = vld [vmem:[%s3 + $0x20] sm:$0xf]
      %v296 = vld [vmem:[%s3 + $0x24] sm:$0xf]
      %v297 = vld [vmem:[%s3 + $0x28] sm:$0xf]
      %v298 = vld [vmem:[%s3 + $0x2c] sm:$0xf]
      %v299 = vld [vmem:[%s3 + $0x30] sm:$0xf]
      %v300 = vld [vmem:[%s3 + $0x34] sm:$0xf]
      %v301 = vld [vmem:[%s3 + $0x38] sm:$0xf]
      %v302 = vld [vmem:[%s3 + $0x3c] sm:$0xf]
      %v303 = vld [vmem:[%s4] sm:$0x1]
      %v305 = vlaneseq
      %v306 = vshrl.u32 %v305, 7
      %v307 = vsub.s32 0, %v306
      %v308 = vrot.slane %v303, %v307
      %v326 = vunpack.c.l.b16 %v287
      %v327 = vunpack.c.l.b16 %v288
      %v328 = vunpack.c.l.b16 %v289
      %v329 = vunpack.c.l.b16 %v290
      %v330 = vunpack.c.l.b16 %v291
      %v331 = vunpack.c.l.b16 %v292
      %v332 = vunpack.c.l.b16 %v293
      %v333 = vunpack.c.l.b16 %v294
      %v334 = vunpack.c.l.b16 %v295
      %v335 = vunpack.c.l.b16 %v296
      %v336 = vunpack.c.l.b16 %v297
      %v337 = vunpack.c.l.b16 %v298
      %v338 = vunpack.c.l.b16 %v299
      %v339 = vunpack.c.l.b16 %v300
      %v340 = vunpack.c.l.b16 %v301
      %v341 = vunpack.c.l.b16 %v302
      %v342 = vpack.c.b16 %v327, %v326
      %v343 = vpack.c.b16 %v329, %v328
      %v344 = vpack.c.b16 %v331, %v330
      %v345 = vpack.c.b16 %v333, %v332
      %v346 = vpack.c.b16 %v335, %v334
      %v347 = vpack.c.b16 %v337, %v336
      %v348 = vpack.c.b16 %v339, %v338
      %v349 = vpack.c.b16 %v341, %v340
      %358 = vmatprep.subr.bf16.mxu0 0
      %359 = vmatpush1.bf16.msra.mxu0 %v349
      %360 = vmatprep.subr.bf16.mxu0 0
      %361 = vmatpush1.bf16.msra.mxu0 %v348
      %362 = vmatprep.subr.bf16.mxu0 0
      %363 = vmatpush1.bf16.msra.mxu0 %v347
      %364 = vmatprep.subr.bf16.mxu0 0
      %365 = vmatpush1.bf16.msra.mxu0 %v346
      %366 = vmatprep.subr.bf16.mxu0 0
      %367 = vmatpush1.bf16.msra.mxu0 %v345
      %368 = vmatprep.subr.bf16.mxu0 0
      %369 = vmatpush1.bf16.msra.mxu0 %v344
      %370 = vmatprep.subr.bf16.mxu0 0
      %371 = vmatpush1.bf16.msra.mxu0 %v343
      %372 = vmatprep.subr.bf16.mxu0 0
      %373 = vmatpush1.bf16.msra.mxu0 %v342
      %374 = vmatprep.subr.bf16.mxu0 0
      %375 = vmatpush2.bf16.msra.mxu0 0
      %376 = vmatprep.subr.bf16.mxu0 0
      %377 = vmatpush2.bf16.msra.mxu0 0
      %378 = vmatprep.subr.bf16.mxu0 0
      %379 = vmatpush2.bf16.msra.mxu0 0
      %380 = vmatprep.subr.bf16.mxu0 0
      %381 = vmatpush2.bf16.msra.mxu0 0
      %382 = vmatprep.subr.bf16.mxu0 0
      %383 = vmatpush2.bf16.msra.mxu0 0
      %384 = vmatprep.subr.bf16.mxu0 0
      %385 = vmatpush2.bf16.msra.mxu0 0
      %386 = vmatprep.subr.bf16.mxu0 0
      %387 = vmatpush2.bf16.msra.mxu0 0
      %388 = vmatprep.subr.bf16.mxu0 0
      %389 = vmatpush2.bf16.msra.mxu0 0
      %390 = vmatprep.mubr.bf16.mxu0 0
      %391 = vmatmul.mubr.bf16.gmra.mxu0 %v283
      %v392 = vpop.f32.mrf.mxu0
      %v393 = vadd.f32 %v308, %v392
      %v394 = vpop.f32.mrf.mxu0
      %v395 = vpop.f32.mrf.mxu0
      %v396 = vadd.f32 %v308, %v395
      %v397 = vpop.f32.mrf.mxu0
      %398 = vmatprep.mubr.bf16.mxu0 0
      %399 = vmatmul.mubr.bf16.gmra.mxu0 %v284
      %v400 = vpop.f32.mrf.mxu0
      %v401 = vadd.f32 %v308, %v400
      %v402 = vpop.f32.mrf.mxu0
      %v403 = vpop.f32.mrf.mxu0
      %v404 = vadd.f32 %v308, %v403
      %v405 = vpop.f32.mrf.mxu0
      %406 = vmatprep.mubr.bf16.mxu0 0
      %407 = vmatmul.mubr.bf16.gmra.mxu0 %v285
      %v408 = vpop.f32.mrf.mxu0
      %v409 = vadd.f32 %v308, %v408
      %v410 = vpop.f32.mrf.mxu0
      %v411 = vpop.f32.mrf.mxu0
      %v412 = vadd.f32 %v308, %v411
      %v413 = vpop.f32.mrf.mxu0
      %414 = vmatprep.mubr.bf16.mxu0 0
      %415 = vmatmul.mubr.bf16.gmra.mxu0 %v286
      %v416 = vpop.f32.mrf.mxu0
      %v417 = vadd.f32 %v308, %v416
      %v418 = vpop.f32.mrf.mxu0
      %v419 = vpop.f32.mrf.mxu0
      %v420 = vadd.f32 %v308, %v419
      %v421 = vpop.f32.mrf.mxu0
      %422 = vdwg.mxu0
      %v423 = vmax.f32 %v393, 0.0
      %v424 = vmax.f32 %v396, 0.0
      %v425 = vmax.f32 %v401, 0.0
      %v426 = vmax.f32 %v404, 0.0
      %v427 = vmax.f32 %v409, 0.0
      %v428 = vmax.f32 %v412, 0.0
      %v429 = vmax.f32 %v417, 0.0
      %v430 = vmax.f32 %v420, 0.0
      %v431 = vpack.c.bf16 %v424, %v423
      %v432 = vpack.c.bf16 %v426, %v425
      %v433 = vpack.c.bf16 %v428, %v427
      %v434 = vpack.c.bf16 %v430, %v429
      %v439 = vunpack.c.l.b16 %v431
      %v440 = vunpack.c.h.b16 %v431
      %v441 = vunpack.c.l.b16 %v432
      %v442 = vunpack.c.h.b16 %v432
      %v443 = vunpack.c.l.b16 %v433
      %v444 = vunpack.c.h.b16 %v433
      %v445 = vunpack.c.l.b16 %v434
      %v446 = vunpack.c.h.b16 %v434
      %v447 = vpack.c.b16 %v439, %v439
      %v448 = vpack.c.b16 %v440, %v440
      %v449 = vpack.c.b16 %v441, %v441
      %v450 = vpack.c.b16 %v442, %v442
      %v451 = vpack.c.b16 %v443, %v443
      %v452 = vpack.c.b16 %v444, %v444
      %v453 = vpack.c.b16 %v445, %v445
      %v454 = vpack.c.b16 %v446, %v446
      %463 = vst [vmem:[%s226] sm:$0xf] %v447
      %464 = vst [vmem:[%s226 + $0x4] sm:$0xf] %v448
      %465 = vst [vmem:[%s226 + $0x8] sm:$0xf] %v449
      %466 = vst [vmem:[%s226 + $0xc] sm:$0xf] %v450
      %467 = vst [vmem:[%s226 + $0x10] sm:$0xf] %v451
      %468 = vst [vmem:[%s226 + $0x14] sm:$0xf] %v452
      %469 = vst [vmem:[%s226 + $0x18] sm:$0xf] %v453
      %470 = vst [vmem:[%s226 + $0x1c] sm:$0xf] %v454
      %s471 = smul.u32 8, %s16
      %p472 = scmp.lt.s32.totalorder %s471, 15
      %s473 = scalar_select %p472, %s471, 15
      %s474 = smul.addr %s473, 4
      %s475 = scalar_lea.vmem %s5, %s474
      // Predicated region
      $region41: #{_gnn_forward_device.7} parent=39 // pred_check
        %p476 = pneg %p144
      $region42: #{_gnn_forward_device.7} parent=39 // pred_check_branch
        %478 = sbr.rel (%p476) target = $region44
      $region43: #{_gnn_forward_device.7} parent=39 // pred_region
        %s479 = smul.u32 8, %s16
      $region44: #{_gnn_forward_device.7} parent=39 // pred_fallthru
        _
    $region40: #{_gnn_forward_device.7} parent=5 // pred_fallthru
      _
    %p480 = scmp.le.s32.totalorder 2, %s11
    // Predicated region
    $region45: #{_gnn_forward_device.7} parent=5 // pred_check
      %p481 = pneg %p480
    $region46: #{_gnn_forward_device.7} parent=5 // pred_check_branch
      %483 = sbr.rel (%p481) target = $region48
    $region47: #{_gnn_forward_device.7} parent=5 // pred_region
      %s484 = ssub.s32 %s11, 2
      // Predicated region
      $region49: #{_gnn_forward_device.7} parent=47 // pred_check
        %p485 = pneg %p150
      $region50: #{_gnn_forward_device.7} parent=47 // pred_check_branch
        %487 = sbr.rel (%p485) target = $region52
      $region51: #{_gnn_forward_device.7} parent=47 // pred_region
        %s488 = smul.u32 8, %s17
        %p489 = scmp.lt.s32.totalorder %s488, 15
        %s490 = scalar_select %p489, %s488, 15
        %s491 = smul.addr %s490, 4
        %s492 = scalar_lea.vmem %s5, %s491
      $region52: #{_gnn_forward_device.7} parent=47 // pred_fallthru
        _
    $region48: #{_gnn_forward_device.7} parent=5 // pred_fallthru
      _
  $region6: #{_gnn_forward_device.7} parent=0 // loop_footer
    %s15 = sadd.s32 1, %s11
  $region7: #{_gnn_forward_device.7} parent=0 // loop_footer_branch
    %10 = sbr.rel target = $region3
  $region8: #{_gnn_forward_device.7} parent=0 // loop_exit
    _

// kernel: _gnn_forward_device.9
$region0: #{_gnn_forward_device.9}
  #allocation0 [shape = 'u32[]', space=smem, size = 0x4, offset = 0x4, fixed_abs, tag = 'smem constant byte address 0x4 - core index']
  #allocation1 [shape = 'u32[144,128]{1,0:T(1,128)}', space=vmem, size = 0x12000, scoped, tag = 'internal scratch']
  %s0 = inlined_call_operand.vmem [shape: bf16[128,128], index: 0, kind: input, shape index: {}]
  %s1 = inlined_call_operand.vmem [shape: f32[1,128], index: 1, kind: input, shape index: {}]
  %s2 = inlined_call_operand.vmem [shape: f32[1,128], index: 2, kind: input, shape index: {}]
  %s3 = inlined_call_operand.vmem [shape: bf16[128,128], index: 3, kind: input, shape index: {}]
  %s4 = inlined_call_operand.vmem [shape: f32[1,128], index: 4, kind: input, shape index: {}]
  %s5 = inlined_call_operand.vmem [shape: bf16[128,128], index: 5, kind: input, shape index: {}]
  %s6 = inlined_call_operand.vmem [shape: f32[128,128], index: 6, kind: output, shape index: {0}]
  %s7 = inlined_call_operand.vmem [shape: f32[128,128], index: 7, kind: output, shape index: {1}]
  %8 = xla_tuple %s6, %s7
  %s9 = sld [smem:[#allocation0]]
  $region65: #{_gnn_forward_device.9} parent=0
    _
  %s11 = ssub.s32 1, %s9
  %s12 = scalar_select 0, %s11, %s9
  loop: start=0, step=1, limit=4
  $region2: #{_gnn_forward_device.9} parent=0 // loop_pre_header
    _
  $region3: #{_gnn_forward_device.9} parent=0 // loop_header
    %s14 = sphi 0, %s18
    %p15 = scmp.ge.s32.totalorder %s14, 4
    %s24 = sphi 0, %s26
    %s27 = sphi 0, %s24
    %s28 = sphi 0, %s27
    %s44 = sphi 0, %s28
    %s48 = sphi 0, %s48
    %s50 = sphi 0, %s48
    %s51 = sphi 0, %s50
    %s65 = sphi 0, %s51
    %s69 = sphi 0, %s69
    %s71 = sphi 0, %s69
    %s72 = sphi 0, %s71
    %s86 = sphi 0, %s72
    %s90 = sphi 0, %s90
    %s92 = sphi 0, %s90
    %s93 = sphi 0, %s92
    %s107 = sphi 0, %s93
    %s111 = sphi 0, %s111
    %s113 = sphi 0, %s111
    %s114 = sphi 0, %s113
    %s128 = sphi 0, %s114
    %s132 = sphi 0, %s132
    %s134 = sphi 0, %s132
    %s135 = sphi 0, %s134
    %s149 = sphi 0, %s135
    %s155 = sphi 0, %s157
    %s158 = sphi 0, %s155
    %s159 = sphi 0, %s158
    %s175 = sphi 0, %s159
    %s181 = sphi 0, %s183
    %s184 = sphi 0, %s181
    %s185 = sphi 0, %s184
    %s201 = sphi 0, %s185
  $region4: #{_gnn_forward_device.9} parent=0 // loop_header_branch
    %17 = sbr.rel (%p15) target = $region8
  $region5: #{_gnn_forward_device.9} parent=0 // loop_body
    %s19 = ssub.s32 %s14, 1
    %s20 = ssub.s32 %s14, 2
    %s21 = sadd.s32 %s14, 1
    %s22 = ssub.s32 %s14, %s21
    %p23 = scmp.eq.s32.totalorder %s22, 0
    %s25 = sadd.s32 %s24, 1
    %s26 = scalar_select %p23, %s24, %s25
    %p29 = pneg %p23
    %p30 = scmp.eq.s32.totalorder %s14, 1
    %p31 = por %p29, %p30
    %p32 = scmp.ne.s32.totalorder %s24, %s27
    %p33 = scmp.eq.s32.totalorder %s14, 0
    %p34 = por %p32, %p33
    %p35 = scmp.ne.s32.totalorder %s24, %s27
    %p36 = scmp.eq.s32.totalorder %s19, 1
    %p37 = por %p35, %p36
    %p38 = scmp.ne.s32.totalorder %s27, %s28
    %p39 = scmp.eq.s32.totalorder %s19, 0
    %p40 = por %p38, %p39
    %p41 = scmp.ne.s32.totalorder %s27, %s28
    %p42 = scmp.eq.s32.totalorder %s20, 1
    %p43 = por %p41, %p42
    %p45 = scmp.ne.s32.totalorder %s28, %s44
    %p46 = scmp.eq.s32.totalorder %s20, 0
    %p47 = por %p45, %p46
    %s49 = sadd.s32 %s48, 1
    %p52 = scmp.eq.s32.totalorder %s14, 1
    %p53 = scmp.ne.s32.totalorder %s48, %s50
    %p54 = scmp.eq.s32.totalorder %s14, 0
    %p55 = por %p53, %p54
    %p56 = scmp.ne.s32.totalorder %s48, %s50
    %p57 = scmp.eq.s32.totalorder %s19, 1
    %p58 = por %p56, %p57
    %p59 = scmp.ne.s32.totalorder %s50, %s51
    %p60 = scmp.eq.s32.totalorder %s19, 0
    %p61 = por %p59, %p60
    %p62 = scmp.ne.s32.totalorder %s50, %s51
    %p63 = scmp.eq.s32.totalorder %s20, 1
    %p64 = por %p62, %p63
    %p66 = scmp.ne.s32.totalorder %s51, %s65
    %p67 = scmp.eq.s32.totalorder %s20, 0
    %p68 = por %p66, %p67
    %s70 = sadd.s32 %s69, 1
    %p73 = scmp.eq.s32.totalorder %s14, 1
    %p74 = scmp.ne.s32.totalorder %s69, %s71
    %p75 = scmp.eq.s32.totalorder %s14, 0
    %p76 = por %p74, %p75
    %p77 = scmp.ne.s32.totalorder %s69, %s71
    %p78 = scmp.eq.s32.totalorder %s19, 1
    %p79 = por %p77, %p78
    %p80 = scmp.ne.s32.totalorder %s71, %s72
    %p81 = scmp.eq.s32.totalorder %s19, 0
    %p82 = por %p80, %p81
    %p83 = scmp.ne.s32.totalorder %s71, %s72
    %p84 = scmp.eq.s32.totalorder %s20, 1
    %p85 = por %p83, %p84
    %p87 = scmp.ne.s32.totalorder %s72, %s86
    %p88 = scmp.eq.s32.totalorder %s20, 0
    %p89 = por %p87, %p88
    %s91 = sadd.s32 %s90, 1
    %p94 = scmp.eq.s32.totalorder %s14, 1
    %p95 = scmp.ne.s32.totalorder %s90, %s92
    %p96 = scmp.eq.s32.totalorder %s14, 0
    %p97 = por %p95, %p96
    %p98 = scmp.ne.s32.totalorder %s90, %s92
    %p99 = scmp.eq.s32.totalorder %s19, 1
    %p100 = por %p98, %p99
    %p101 = scmp.ne.s32.totalorder %s92, %s93
    %p102 = scmp.eq.s32.totalorder %s19, 0
    %p103 = por %p101, %p102
    %p104 = scmp.ne.s32.totalorder %s92, %s93
    %p105 = scmp.eq.s32.totalorder %s20, 1
    %p106 = por %p104, %p105
    %p108 = scmp.ne.s32.totalorder %s93, %s107
    %p109 = scmp.eq.s32.totalorder %s20, 0
    %p110 = por %p108, %p109
    %s112 = sadd.s32 %s111, 1
    %p115 = scmp.eq.s32.totalorder %s14, 1
    %p116 = scmp.ne.s32.totalorder %s111, %s113
    %p117 = scmp.eq.s32.totalorder %s14, 0
    %p118 = por %p116, %p117
    %p119 = scmp.ne.s32.totalorder %s111, %s113
    %p120 = scmp.eq.s32.totalorder %s19, 1
    %p121 = por %p119, %p120
    %p122 = scmp.ne.s32.totalorder %s113, %s114
    %p123 = scmp.eq.s32.totalorder %s19, 0
    %p124 = por %p122, %p123
    %p125 = scmp.ne.s32.totalorder %s113, %s114
    %p126 = scmp.eq.s32.totalorder %s20, 1
    %p127 = por %p125, %p126
    %p129 = scmp.ne.s32.totalorder %s114, %s128
    %p130 = scmp.eq.s32.totalorder %s20, 0
    %p131 = por %p129, %p130
    %s133 = sadd.s32 %s132, 1
    %p136 = scmp.eq.s32.totalorder %s14, 1
    %p137 = scmp.ne.s32.totalorder %s132, %s134
    %p138 = scmp.eq.s32.totalorder %s14, 0
    %p139 = por %p137, %p138
    %p140 = scmp.ne.s32.totalorder %s132, %s134
    %p141 = scmp.eq.s32.totalorder %s19, 1
    %p142 = por %p140, %p141
    %p143 = scmp.ne.s32.totalorder %s134, %s135
    %p144 = scmp.eq.s32.totalorder %s19, 0
    %p145 = por %p143, %p144
    %p146 = scmp.ne.s32.totalorder %s134, %s135
    %p147 = scmp.eq.s32.totalorder %s20, 1
    %p148 = por %p146, %p147
    %p150 = scmp.ne.s32.totalorder %s135, %s149
    %p151 = scmp.eq.s32.totalorder %s20, 0
    %p152 = por %p150, %p151
    %s153 = ssub.s32 %s14, %s21
    %p154 = scmp.eq.s32.totalorder %s153, 0
    %s156 = sadd.s32 %s155, 1
    %s157 = scalar_select %p154, %s155, %s156
    %p160 = pneg %p154
    %p161 = scmp.eq.s32.totalorder %s14, 1
    %p162 = por %p160, %p161
    %p163 = scmp.ne.s32.totalorder %s155, %s158
    %p164 = scmp.eq.s32.totalorder %s14, 0
    %p165 = por %p163, %p164
    %p166 = scmp.ne.s32.totalorder %s155, %s158
    %p167 = scmp.eq.s32.totalorder %s19, 1
    %p168 = por %p166, %p167
    %p169 = scmp.ne.s32.totalorder %s158, %s159
    %p170 = scmp.eq.s32.totalorder %s19, 0
    %p171 = por %p169, %p170
    %p172 = scmp.ne.s32.totalorder %s158, %s159
    %p173 = scmp.eq.s32.totalorder %s20, 1
    %p174 = por %p172, %p173
    %p176 = scmp.ne.s32.totalorder %s159, %s175
    %p177 = scmp.eq.s32.totalorder %s20, 0
    %p178 = por %p176, %p177
    %s179 = ssub.s32 %s14, %s21
    %p180 = scmp.eq.s32.totalorder %s179, 0
    %s182 = sadd.s32 %s181, 1
    %s183 = scalar_select %p180, %s181, %s182
    %p186 = pneg %p180
    %p187 = scmp.eq.s32.totalorder %s14, 1
    %p188 = por %p186, %p187
    %p189 = scmp.ne.s32.totalorder %s181, %s184
    %p190 = scmp.eq.s32.totalorder %s14, 0
    %p191 = por %p189, %p190
    %p192 = scmp.ne.s32.totalorder %s181, %s184
    %p193 = scmp.eq.s32.totalorder %s19, 1
    %p194 = por %p192, %p193
    %p195 = scmp.ne.s32.totalorder %s184, %s185
    %p196 = scmp.eq.s32.totalorder %s19, 0
    %p197 = por %p195, %p196
    %p198 = scmp.ne.s32.totalorder %s184, %s185
    %p199 = scmp.eq.s32.totalorder %s20, 1
    %p200 = por %p198, %p199
    %p202 = scmp.ne.s32.totalorder %s185, %s201
    %p203 = scmp.eq.s32.totalorder %s20, 0
    %p204 = por %p202, %p203
    %p205 = scmp.le.s32.totalorder 1, %s14
    %p206 = scmp.lt.s32.totalorder %s14, 3
    %p207 = pnand %p205, %p206
    %p208 = pneg %p207
    // Predicated region
    $region9: #{_gnn_forward_device.9} parent=5 // pred_check
      _
    $region10: #{_gnn_forward_device.9} parent=5 // pred_check_branch
      %210 = sbr.rel (%p207) target = $region12
    $region11: #{_gnn_forward_device.9} parent=5 // pred_region
      %s211 = ssub.s32 %s14, 1
      // Predicated region
      $region13: #{_gnn_forward_device.9} parent=11 // pred_check
        %p212 = pneg %p61
      $region14: #{_gnn_forward_device.9} parent=11 // pred_check_branch
        %214 = sbr.rel (%p212) target = $region16
      $region15: #{_gnn_forward_device.9} parent=11 // pred_region
        _
      $region16: #{_gnn_forward_device.9} parent=11 // pred_fallthru
        _
      // Predicated region
      $region17: #{_gnn_forward_device.9} parent=11 // pred_check
        %p215 = pneg %p82
      $region18: #{_gnn_forward_device.9} parent=11 // pred_check_branch
        %217 = sbr.rel (%p215) target = $region20
      $region19: #{_gnn_forward_device.9} parent=11 // pred_region
        _
      $region20: #{_gnn_forward_device.9} parent=11 // pred_fallthru
        _
      // Predicated region
      $region21: #{_gnn_forward_device.9} parent=11 // pred_check
        %p218 = pneg %p103
      $region22: #{_gnn_forward_device.9} parent=11 // pred_check_branch
        %220 = sbr.rel (%p218) target = $region24
      $region23: #{_gnn_forward_device.9} parent=11 // pred_region
        _
      $region24: #{_gnn_forward_device.9} parent=11 // pred_fallthru
        _
      // Predicated region
      $region25: #{_gnn_forward_device.9} parent=11 // pred_check
        %p221 = pneg %p124
      $region26: #{_gnn_forward_device.9} parent=11 // pred_check_branch
        %223 = sbr.rel (%p221) target = $region28
      $region27: #{_gnn_forward_device.9} parent=11 // pred_region
        _
      $region28: #{_gnn_forward_device.9} parent=11 // pred_fallthru
        _
      // Predicated region
      $region29: #{_gnn_forward_device.9} parent=11 // pred_check
        %p224 = pneg %p145
      $region30: #{_gnn_forward_device.9} parent=11 // pred_check_branch
        %226 = sbr.rel (%p224) target = $region32
      $region31: #{_gnn_forward_device.9} parent=11 // pred_region
        _
      $region32: #{_gnn_forward_device.9} parent=11 // pred_fallthru
        _
    $region12: #{_gnn_forward_device.9} parent=5 // pred_fallthru
      _
    %p227 = scmp.lt.s32.totalorder %s14, 2
    // Predicated region
    $region33: #{_gnn_forward_device.9} parent=5 // pred_check
      %p228 = pneg %p227
    $region34: #{_gnn_forward_device.9} parent=5 // pred_check_branch
      %230 = sbr.rel (%p228) target = $region36
    $region35: #{_gnn_forward_device.9} parent=5 // pred_region
      // Predicated region
      $region37: #{_gnn_forward_device.9} parent=35 // pred_check
        %p231 = pneg %p34
      $region38: #{_gnn_forward_device.9} parent=35 // pred_check_branch
        %233 = sbr.rel (%p231) target = $region40
      $region39: #{_gnn_forward_device.9} parent=35 // pred_region
        %s234 = smul.u32 8, %s14
        %p235 = scmp.lt.s32.totalorder %s234, 15
        %s236 = scalar_select %p235, %s234, 15
        %s237 = smul.addr %s236, 4
        %s238 = scalar_lea.vmem %s0, %s237
        %s239 = smul.u32 8, %s14
      $region40: #{_gnn_forward_device.9} parent=35 // pred_fallthru
        _
    $region36: #{_gnn_forward_device.9} parent=5 // pred_fallthru
      _
    %p240 = scmp.le.s32.totalorder 1, %s14
    %p241 = scmp.lt.s32.totalorder %s14, 3
    %p242 = pnand %p240, %p241
    %p243 = pneg %p242
    // Predicated region
    $region41: #{_gnn_forward_device.9} parent=5 // pred_check
      _
    $region42: #{_gnn_forward_device.9} parent=5 // pred_check_branch
      %245 = sbr.rel (%p242) target = $region44
    $region43: #{_gnn_forward_device.9} parent=5 // pred_region
      %s246 = ssub.s32 %s14, 1
      %s247 = smul.u32 8, %s19
      %p248 = scmp.lt.s32.totalorder %s247, 15
      %s249 = scalar_select %p248, %s247, 15
      %s250 = smul.addr %s249, 4
      %s251 = scalar_lea.vmem %s0, %s250
      %p252 = pneg %p40
      %p253 = pneg %p37
      %p254 = pneg %p61
      %p255 = pneg %p58
      %p256 = pneg %p82
      %p257 = pneg %p79
      %p258 = pneg %p103
      %p259 = pneg %p100
      %p260 = pneg %p124
      %p261 = pneg %p121
      %p262 = pneg %p145
      %p263 = pneg %p142
      %p264 = pneg %p171
      %p265 = pneg %p168
      %s266 = smul.u32 8, %s19
      %p267 = scmp.lt.s32.totalorder %s266, 15
      %s268 = scalar_select %p267, %s266, 15
      %s269 = smul.addr %s268, 8
      %s270 = scalar_lea.vmem %s6, %s269
      %p271 = pneg %p197
      %p272 = pneg %p194
      %s273 = smul.u32 8, %s19
      %p274 = scmp.lt.s32.totalorder %s273, 15
      %s275 = scalar_select %p274, %s273, 15
      %s276 = smul.addr %s275, 8
      %s277 = scalar_lea.vmem %s7, %s276
      %s278 = smul.u32 8, %s19
      %p279 = scmp.lt.s32.totalorder %s278, 15
      %s280 = scalar_select %p279, %s278, 15
      %s281 = smul.addr %s280, 4
      %s282 = scalar_lea.vmem %s0, %s281
      %s283 = smul.u32 8, %s19
      %s284 = smul.u32 8, %s19
      %p285 = scmp.lt.s32.totalorder %s284, 15
      %s286 = scalar_select %p285, %s284, 15
      %s287 = smul.addr %s286, 8
      %s288 = scalar_lea.vmem %s6, %s287
      %s289 = smul.u32 8, %s19
      %s290 = smul.u32 8, %s19
      %p291 = scmp.lt.s32.totalorder %s290, 15
      %s292 = scalar_select %p291, %s290, 15
      %s293 = smul.addr %s292, 8
      %s294 = scalar_lea.vmem %s7, %s293
      %s295 = smul.u32 8, %s19
      %v297 = vld [vmem:[%s282] sm:$0xf]
      %v298 = vld [vmem:[%s282 + $0x4] sm:$0xf]
      %v299 = vld [vmem:[%s282 + $0x8] sm:$0xf]
      %v300 = vld [vmem:[%s282 + $0xc] sm:$0xf]
      %v301 = vld [vmem:[%s282 + $0x10] sm:$0xf]
      %v302 = vld [vmem:[%s282 + $0x14] sm:$0xf]
      %v303 = vld [vmem:[%s282 + $0x18] sm:$0xf]
      %v304 = vld [vmem:[%s282 + $0x1c] sm:$0xf]
      %v305 = vunpack.c.l.bf16 %v297
      %v306 = vunpack.c.l.bf16 %v298
      %v307 = vunpack.c.l.bf16 %v299
      %v308 = vunpack.c.l.bf16 %v300
      %v309 = vunpack.c.l.bf16 %v301
      %v310 = vunpack.c.l.bf16 %v302
      %v311 = vunpack.c.l.bf16 %v303
      %v312 = vunpack.c.l.bf16 %v304
      %v313 = vld [vmem:[%s1] sm:$0x1]
      %v315 = vlaneseq
      %v316 = vshrl.u32 %v315, 7
      %v317 = vsub.s32 0, %v316
      %v318 = vrot.slane %v313, %v317
      %v320 = vmul.f32 %v305, %v318
      %v321 = vmul.f32 %v306, %v318
      %v322 = vmul.f32 %v307, %v318
      %v323 = vmul.f32 %v308, %v318
      %v324 = vmul.f32 %v309, %v318
      %v325 = vmul.f32 %v310, %v318
      %v326 = vmul.f32 %v311, %v318
      %v327 = vmul.f32 %v312, %v318
      %v328 = vld [vmem:[%s2] sm:$0x1]
      %v330 = vlaneseq
      %v331 = vshrl.u32 %v330, 7
      %v332 = vsub.s32 0, %v331
      %v333 = vrot.slane %v328, %v332
      %v335 = vadd.f32 %v320, %v333
      %v336 = vadd.f32 %v321, %v333
      %v337 = vadd.f32 %v322, %v333
      %v338 = vadd.f32 %v323, %v333
      %v339 = vadd.f32 %v324, %v333
      %v340 = vadd.f32 %v325, %v333
      %v341 = vadd.f32 %v326, %v333
      %v342 = vadd.f32 %v327, %v333
      %v343 = vmax.f32 %v335, 0.0
      %v344 = vmax.f32 %v336, 0.0
      %v345 = vmax.f32 %v337, 0.0
      %v346 = vmax.f32 %v338, 0.0
      %v347 = vmax.f32 %v339, 0.0
      %v348 = vmax.f32 %v340, 0.0
      %v349 = vmax.f32 %v341, 0.0
      %v350 = vmax.f32 %v342, 0.0
      %v351 = vpack.c.bf16 %v344, %v343
      %v352 = vpack.c.bf16 %v346, %v345
      %v353 = vpack.c.bf16 %v348, %v347
      %v354 = vpack.c.bf16 %v350, %v349
      %v355 = vld [vmem:[%s3] sm:$0xf]
      %v356 = vld [vmem:[%s3 + $0x4] sm:$0xf]
      %v357 = vld [vmem:[%s3 + $0x8] sm:$0xf]
      %v358 = vld [vmem:[%s3 + $0xc] sm:$0xf]
      %v359 = vld [vmem:[%s3 + $0x10] sm:$0xf]
      %v360 = vld [vmem:[%s3 + $0x14] sm:$0xf]
      %v361 = vld [vmem:[%s3 + $0x18] sm:$0xf]
      %v362 = vld [vmem:[%s3 + $0x1c] sm:$0xf]
      %v363 = vld [vmem:[%s3 + $0x20] sm:$0xf]
      %v364 = vld [vmem:[%s3 + $0x24] sm:$0xf]
      %v365 = vld [vmem:[%s3 + $0x28] sm:$0xf]
      %v366 = vld [vmem:[%s3 + $0x2c] sm:$0xf]
      %v367 = vld [vmem:[%s3 + $0x30] sm:$0xf]
      %v368 = vld [vmem:[%s3 + $0x34] sm:$0xf]
      %v369 = vld [vmem:[%s3 + $0x38] sm:$0xf]
      %v370 = vld [vmem:[%s3 + $0x3c] sm:$0xf]
      %v371 = vld [vmem:[%s4] sm:$0x1]
      %v373 = vlaneseq
      %v374 = vshrl.u32 %v373, 7
      %v375 = vsub.s32 0, %v374
      %v376 = vrot.slane %v371, %v375
      %v394 = vunpack.c.l.b16 %v355
      %v395 = vunpack.c.l.b16 %v356
      %v396 = vunpack.c.l.b16 %v357
      %v397 = vunpack.c.l.b16 %v358
      %v398 = vunpack.c.l.b16 %v359
      %v399 = vunpack.c.l.b16 %v360
      %v400 = vunpack.c.l.b16 %v361
      %v401 = vunpack.c.l.b16 %v362
      %v402 = vunpack.c.l.b16 %v363
      %v403 = vunpack.c.l.b16 %v364
      %v404 = vunpack.c.l.b16 %v365
      %v405 = vunpack.c.l.b16 %v366
      %v406 = vunpack.c.l.b16 %v367
      %v407 = vunpack.c.l.b16 %v368
      %v408 = vunpack.c.l.b16 %v369
      %v409 = vunpack.c.l.b16 %v370
      %v410 = vpack.c.b16 %v395, %v394
      %v411 = vpack.c.b16 %v397, %v396
      %v412 = vpack.c.b16 %v399, %v398
      %v413 = vpack.c.b16 %v401, %v400
      %v414 = vpack.c.b16 %v403, %v402
      %v415 = vpack.c.b16 %v405, %v404
      %v416 = vpack.c.b16 %v407, %v406
      %v417 = vpack.c.b16 %v409, %v408
      %426 = vmatprep.subr.bf16.mxu0 0
      %427 = vmatpush1.bf16.msra.mxu0 %v417
      %428 = vmatprep.subr.bf16.mxu0 0
      %429 = vmatpush1.bf16.msra.mxu0 %v416
      %430 = vmatprep.subr.bf16.mxu0 0
      %431 = vmatpush1.bf16.msra.mxu0 %v415
      %432 = vmatprep.subr.bf16.mxu0 0
      %433 = vmatpush1.bf16.msra.mxu0 %v414
      %434 = vmatprep.subr.bf16.mxu0 0
      %435 = vmatpush1.bf16.msra.mxu0 %v413
      %436 = vmatprep.subr.bf16.mxu0 0
      %437 = vmatpush1.bf16.msra.mxu0 %v412
      %438 = vmatprep.subr.bf16.mxu0 0
      %439 = vmatpush1.bf16.msra.mxu0 %v411
      %440 = vmatprep.subr.bf16.mxu0 0
      %441 = vmatpush1.bf16.msra.mxu0 %v410
      %442 = vmatprep.subr.bf16.mxu0 0
      %443 = vmatpush2.bf16.msra.mxu0 0
      %444 = vmatprep.subr.bf16.mxu0 0
      %445 = vmatpush2.bf16.msra.mxu0 0
      %446 = vmatprep.subr.bf16.mxu0 0
      %447 = vmatpush2.bf16.msra.mxu0 0
      %448 = vmatprep.subr.bf16.mxu0 0
      %449 = vmatpush2.bf16.msra.mxu0 0
      %450 = vmatprep.subr.bf16.mxu0 0
      %451 = vmatpush2.bf16.msra.mxu0 0
      %452 = vmatprep.subr.bf16.mxu0 0
      %453 = vmatpush2.bf16.msra.mxu0 0
      %454 = vmatprep.subr.bf16.mxu0 0
      %455 = vmatpush2.bf16.msra.mxu0 0
      %456 = vmatprep.subr.bf16.mxu0 0
      %457 = vmatpush2.bf16.msra.mxu0 0
      %458 = vmatprep.mubr.bf16.mxu0 0
      %459 = vmatmul.mubr.bf16.gmra.mxu0 %v351
      %v460 = vpop.f32.mrf.mxu0
      %v461 = vadd.f32 %v376, %v460
      %v462 = vpop.f32.mrf.mxu0
      %v463 = vpop.f32.mrf.mxu0
      %v464 = vadd.f32 %v376, %v463
      %v465 = vpop.f32.mrf.mxu0
      %466 = vmatprep.mubr.bf16.mxu0 0
      %467 = vmatmul.mubr.bf16.gmra.mxu0 %v352
      %v468 = vpop.f32.mrf.mxu0
      %v469 = vadd.f32 %v376, %v468
      %v470 = vpop.f32.mrf.mxu0
      %v471 = vpop.f32.mrf.mxu0
      %v472 = vadd.f32 %v376, %v471
      %v473 = vpop.f32.mrf.mxu0
      %474 = vmatprep.mubr.bf16.mxu0 0
      %475 = vmatmul.mubr.bf16.gmra.mxu0 %v353
      %v476 = vpop.f32.mrf.mxu0
      %v477 = vadd.f32 %v376, %v476
      %v478 = vpop.f32.mrf.mxu0
      %v479 = vpop.f32.mrf.mxu0
      %v480 = vadd.f32 %v376, %v479
      %v481 = vpop.f32.mrf.mxu0
      %482 = vmatprep.mubr.bf16.mxu0 0
      %483 = vmatmul.mubr.bf16.gmra.mxu0 %v354
      %v484 = vpop.f32.mrf.mxu0
      %v485 = vadd.f32 %v376, %v484
      %v486 = vpop.f32.mrf.mxu0
      %v487 = vpop.f32.mrf.mxu0
      %v488 = vadd.f32 %v376, %v487
      %v489 = vpop.f32.mrf.mxu0
      %490 = vdwg.mxu0
      %491 = vst [vmem:[%s288] sm:$0xff] %v461
      %492 = vst [vmem:[%s288 + $0x8] sm:$0xff] %v464
      %493 = vst [vmem:[%s288 + $0x10] sm:$0xff] %v469
      %494 = vst [vmem:[%s288 + $0x18] sm:$0xff] %v472
      %495 = vst [vmem:[%s288 + $0x20] sm:$0xff] %v477
      %496 = vst [vmem:[%s288 + $0x28] sm:$0xff] %v480
      %497 = vst [vmem:[%s288 + $0x30] sm:$0xff] %v485
      %498 = vst [vmem:[%s288 + $0x38] sm:$0xff] %v488
      %v499 = vpack.c.bf16 %v464, %v461
      %v500 = vpack.c.bf16 %v472, %v469
      %v501 = vpack.c.bf16 %v480, %v477
      %v502 = vpack.c.bf16 %v488, %v485
      %v503 = vld [vmem:[%s5] sm:$0xf]
      %v504 = vld [vmem:[%s5 + $0x4] sm:$0xf]
      %v505 = vld [vmem:[%s5 + $0x8] sm:$0xf]
      %v506 = vld [vmem:[%s5 + $0xc] sm:$0xf]
      %v507 = vld [vmem:[%s5 + $0x10] sm:$0xf]
      %v508 = vld [vmem:[%s5 + $0x14] sm:$0xf]
      %v509 = vld [vmem:[%s5 + $0x18] sm:$0xf]
      %v510 = vld [vmem:[%s5 + $0x1c] sm:$0xf]
      %v511 = vld [vmem:[%s5 + $0x20] sm:$0xf]
      %v512 = vld [vmem:[%s5 + $0x24] sm:$0xf]
      %v513 = vld [vmem:[%s5 + $0x28] sm:$0xf]
      %v514 = vld [vmem:[%s5 + $0x2c] sm:$0xf]
      %v515 = vld [vmem:[%s5 + $0x30] sm:$0xf]
      %v516 = vld [vmem:[%s5 + $0x34] sm:$0xf]
      %v517 = vld [vmem:[%s5 + $0x38] sm:$0xf]
      %v518 = vld [vmem:[%s5 + $0x3c] sm:$0xf]
      %v535 = vunpack.c.l.b16 %v503
      %v536 = vunpack.c.l.b16 %v504
      %v537 = vunpack.c.l.b16 %v505
      %v538 = vunpack.c.l.b16 %v506
      %v539 = vunpack.c.l.b16 %v507
      %v540 = vunpack.c.l.b16 %v508
      %v541 = vunpack.c.l.b16 %v509
      %v542 = vunpack.c.l.b16 %v510
      %v543 = vunpack.c.l.b16 %v511
      %v544 = vunpack.c.l.b16 %v512
      %v545 = vunpack.c.l.b16 %v513
      %v546 = vunpack.c.l.b16 %v514
      %v547 = vunpack.c.l.b16 %v515
      %v548 = vunpack.c.l.b16 %v516
      %v549 = vunpack.c.l.b16 %v517
      %v550 = vunpack.c.l.b16 %v518
      %v551 = vpack.c.b16 %v536, %v535
      %v552 = vpack.c.b16 %v538, %v537
      %v553 = vpack.c.b16 %v540, %v539
      %v554 = vpack.c.b16 %v542, %v541
      %v555 = vpack.c.b16 %v544, %v543
      %v556 = vpack.c.b16 %v546, %v545
      %v557 = vpack.c.b16 %v548, %v547
      %v558 = vpack.c.b16 %v550, %v549
      %567 = vmatprep.subr.bf16.mxu0 0
      %568 = vmatpush1.bf16.msra.mxu0 %v558
      %569 = vmatprep.subr.bf16.mxu0 0
      %570 = vmatpush1.bf16.msra.mxu0 %v557
      %571 = vmatprep.subr.bf16.mxu0 0
      %572 = vmatpush1.bf16.msra.mxu0 %v556
      %573 = vmatprep.subr.bf16.mxu0 0
      %574 = vmatpush1.bf16.msra.mxu0 %v555
      %575 = vmatprep.subr.bf16.mxu0 0
      %576 = vmatpush1.bf16.msra.mxu0 %v554
      %577 = vmatprep.subr.bf16.mxu0 0
      %578 = vmatpush1.bf16.msra.mxu0 %v553
      %579 = vmatprep.subr.bf16.mxu0 0
      %580 = vmatpush1.bf16.msra.mxu0 %v552
      %581 = vmatprep.subr.bf16.mxu0 0
      %582 = vmatpush1.bf16.msra.mxu0 %v551
      %583 = vmatprep.subr.bf16.mxu0 0
      %584 = vmatpush2.bf16.msra.mxu0 0
      %585 = vmatprep.subr.bf16.mxu0 0
      %586 = vmatpush2.bf16.msra.mxu0 0
      %587 = vmatprep.subr.bf16.mxu0 0
      %588 = vmatpush2.bf16.msra.mxu0 0
      %589 = vmatprep.subr.bf16.mxu0 0
      %590 = vmatpush2.bf16.msra.mxu0 0
      %591 = vmatprep.subr.bf16.mxu0 0
      %592 = vmatpush2.bf16.msra.mxu0 0
      %593 = vmatprep.subr.bf16.mxu0 0
      %594 = vmatpush2.bf16.msra.mxu0 0
      %595 = vmatprep.subr.bf16.mxu0 0
      %596 = vmatpush2.bf16.msra.mxu0 0
      %597 = vmatprep.subr.bf16.mxu0 0
      %598 = vmatpush2.bf16.msra.mxu0 0
      %599 = vmatprep.mubr.bf16.mxu0 0
      %600 = vmatmul.mubr.bf16.gmra.mxu0 %v499
      %v601 = vpop.f32.mrf.mxu0
      %v602 = vadd.f32 0.0, %v601
      %v603 = vpop.f32.mrf.mxu0
      %v604 = vpop.f32.mrf.mxu0
      %v605 = vadd.f32 0.0, %v604
      %v606 = vpop.f32.mrf.mxu0
      %607 = vmatprep.mubr.bf16.mxu0 0
      %608 = vmatmul.mubr.bf16.gmra.mxu0 %v500
      %v609 = vpop.f32.mrf.mxu0
      %v610 = vadd.f32 0.0, %v609
      %v611 = vpop.f32.mrf.mxu0
      %v612 = vpop.f32.mrf.mxu0
      %v613 = vadd.f32 0.0, %v612
      %v614 = vpop.f32.mrf.mxu0
      %615 = vmatprep.mubr.bf16.mxu0 0
      %616 = vmatmul.mubr.bf16.gmra.mxu0 %v501
      %v617 = vpop.f32.mrf.mxu0
      %v618 = vadd.f32 0.0, %v617
      %v619 = vpop.f32.mrf.mxu0
      %v620 = vpop.f32.mrf.mxu0
      %v621 = vadd.f32 0.0, %v620
      %v622 = vpop.f32.mrf.mxu0
      %623 = vmatprep.mubr.bf16.mxu0 0
      %624 = vmatmul.mubr.bf16.gmra.mxu0 %v502
      %v625 = vpop.f32.mrf.mxu0
      %v626 = vadd.f32 0.0, %v625
      %v627 = vpop.f32.mrf.mxu0
      %v628 = vpop.f32.mrf.mxu0
      %v629 = vadd.f32 0.0, %v628
      %v630 = vpop.f32.mrf.mxu0
      %631 = vdwg.mxu0
      %632 = vst [vmem:[%s294] sm:$0xff] %v602
      %633 = vst [vmem:[%s294 + $0x8] sm:$0xff] %v605
      %634 = vst [vmem:[%s294 + $0x10] sm:$0xff] %v610
      %635 = vst [vmem:[%s294 + $0x18] sm:$0xff] %v613
      %636 = vst [vmem:[%s294 + $0x20] sm:$0xff] %v618
      %637 = vst [vmem:[%s294 + $0x28] sm:$0xff] %v621
      %638 = vst [vmem:[%s294 + $0x30] sm:$0xff] %v626
      %639 = vst [vmem:[%s294 + $0x38] sm:$0xff] %v629
      %s640 = smul.u32 8, %s19
      %p641 = scmp.lt.s32.totalorder %s640, 15
      %s642 = scalar_select %p641, %s640, 15
      %s643 = smul.addr %s642, 8
      %s644 = scalar_lea.vmem %s6, %s643
      %s645 = smul.u32 8, %s19
      %p646 = scmp.lt.s32.totalorder %s645, 15
      %s647 = scalar_select %p646, %s645, 15
      %s648 = smul.addr %s647, 8
      %s649 = scalar_lea.vmem %s7, %s648
      // Predicated region
      $region45: #{_gnn_forward_device.9} parent=43 // pred_check
        %p650 = pneg %p168
      $region46: #{_gnn_forward_device.9} parent=43 // pred_check_branch
        %652 = sbr.rel (%p650) target = $region48
      $region47: #{_gnn_forward_device.9} parent=43 // pred_region
        %s653 = smul.u32 8, %s19
      $region48: #{_gnn_forward_device.9} parent=43 // pred_fallthru
        _
      // Predicated region
      $region49: #{_gnn_forward_device.9} parent=43 // pred_check
        %p654 = pneg %p194
      $region50: #{_gnn_forward_device.9} parent=43 // pred_check_branch
        %656 = sbr.rel (%p654) target = $region52
      $region51: #{_gnn_forward_device.9} parent=43 // pred_region
        %s657 = smul.u32 8, %s19
      $region52: #{_gnn_forward_device.9} parent=43 // pred_fallthru
        _
    $region44: #{_gnn_forward_device.9} parent=5 // pred_fallthru
      _
    %p658 = scmp.le.s32.totalorder 2, %s14
    // Predicated region
    $region53: #{_gnn_forward_device.9} parent=5 // pred_check
      %p659 = pneg %p658
    $region54: #{_gnn_forward_device.9} parent=5 // pred_check_branch
      %661 = sbr.rel (%p659) target = $region56
    $region55: #{_gnn_forward_device.9} parent=5 // pred_region
      %s662 = ssub.s32 %s14, 2
      // Predicated region
      $region57: #{_gnn_forward_device.9} parent=55 // pred_check
        %p663 = pneg %p174
      $region58: #{_gnn_forward_device.9} parent=55 // pred_check_branch
        %665 = sbr.rel (%p663) target = $region60
      $region59: #{_gnn_forward_device.9} parent=55 // pred_region
        %s666 = smul.u32 8, %s20
        %p667 = scmp.lt.s32.totalorder %s666, 15
        %s668 = scalar_select %p667, %s666, 15
        %s669 = smul.addr %s668, 8
        %s670 = scalar_lea.vmem %s6, %s669
      $region60: #{_gnn_forward_device.9} parent=55 // pred_fallthru
        _
      // Predicated region
      $region61: #{_gnn_forward_device.9} parent=55 // pred_check
        %p671 = pneg %p200
      $region62: #{_gnn_forward_device.9} parent=55 // pred_check_branch
        %673 = sbr.rel (%p671) target = $region64
      $region63: #{_gnn_forward_device.9} parent=55 // pred_region
        %s674 = smul.u32 8, %s20
        %p675 = scmp.lt.s32.totalorder %s674, 15
        %s676 = scalar_select %p675, %s674, 15
        %s677 = smul.addr %s676, 8
        %s678 = scalar_lea.vmem %s7, %s677
      $region64: #{_gnn_forward_device.9} parent=55 // pred_fallthru
        _
    $region56: #{_gnn_forward_device.9} parent=5 // pred_fallthru
      _
  $region6: #{_gnn_forward_device.9} parent=0 // loop_footer
    %s18 = sadd.s32 1, %s14
  $region7: #{_gnn_forward_device.9} parent=0 // loop_footer_branch
    %13 = sbr.rel target = $region3
  $region8: #{_gnn_forward_device.9} parent=0 // loop_exit
    _

</llo_original>
